<compile_context>
chip_gen: v5e
topology: v5e:2x2
jax: 0.10.0
libtpu: 0.0.40
codegen_flags: <defaults>
</compile_context>

<pallas_src>
import functools

import jax
import jax.numpy as jnp
import numpy as np
from jax.experimental import pallas as pl
from jax.experimental.pallas import tpu as pltpu


def _round_up(x, m):
    return ((x + m - 1) // m) * m


# --------------------------------------------------------------------------
# Pallas kernel: one tile of flattened rows vs. the whole (padded) codebook.
#   x_ref     : (tile_n, D)  f32   input rows
#   e_ref     : (Kp, D)      bf16  codebook (rows K..Kp-1 are zero padding)
#   esq_ref   : (1, Kp)      f32   ||e_k||^2 (padded rows set to +huge)
#   q_ref     : (tile_n, D)  bf16  quantized rows (output)
#   sqerr_ref : (1, D)       f32   per-column sum of (q - x)^2  (per-core acc)
#   counts_ref: (1, Kp)      f32   per-code selection counts    (per-core acc)
# --------------------------------------------------------------------------
def _vq_kernel(x_ref, e_ref, esq_ref, q_ref, sqerr_ref, counts_ref, *,
               n_valid, tile_n, tiles_per_core):
    c = pl.program_id(0)          # megacore ("parallel") axis
    i = pl.program_id(1)          # row-tile ("arbitrary") axis

    @pl.when(i == 0)
    def _init():
        sqerr_ref[...] = jnp.zeros_like(sqerr_ref)
        counts_ref[...] = jnp.zeros_like(counts_ref)

    x = x_ref[...]                                     # (TN, D) f32
    e = e_ref[...]                                     # (Kp, D) bf16 (no cast)
    kp = e.shape[0]
    d = x.shape[1]

    # Distance scores: ||e_k||^2 - 2 x.e_k  (per-row ||x||^2 constant does not
    # change the argmin).  bf16 operands, f32 accumulation, single MXU pass.
    prod = jax.lax.dot_general(
        x.astype(jnp.bfloat16), e,
        (((1,), (1,)), ((), ())),
        preferred_element_type=jnp.float32)            # (TN, Kp)
    scores = esq_ref[...] - 2.0 * prod                 # (TN, Kp)

    # First-index argmin over the lane (codebook) axis.
    col = jax.lax.broadcasted_iota(jnp.int32, scores.shape, 1)
    min_s = jnp.min(scores, axis=-1, keepdims=True)
    idx = jnp.min(jnp.where(scores == min_s, col, kp), axis=-1, keepdims=True)

    onehot = (col == idx).astype(jnp.float32)          # (TN, Kp)

    # Codebook lookup as one MXU matmul (== encodings @ embedding).  The bf16
    # one-hot is exact (0/1), so each output row equals a bf16 codebook row.
    quantized = jnp.dot(onehot.astype(jnp.bfloat16), e,
                        preferred_element_type=jnp.float32)        # (TN, D) f32
    q_ref[...] = quantized.astype(jnp.bfloat16)        # lossless bf16 store

    # Global-row validity mask (last tile may be partial; duplicated clamped
    # tiles on the parallel axis also get masked out of the reductions here).
    tile_idx = c * tiles_per_core + i
    row = jax.lax.broadcasted_iota(jnp.int32, (tile_n, 1), 0) + tile_idx * tile_n
    valid = row < n_valid                              # (TN, 1) bool

    diff = jnp.where(valid, quantized - x, 0.0)
    sqerr_ref[...] += jnp.sum(diff * diff, axis=0, keepdims=True)          # (1, D)
    counts_ref[...] += jnp.sum(jnp.where(valid, onehot, 0.0),
                               axis=0, keepdims=True)                      # (1, Kp)


# --------------------------------------------------------------------------
# Wrapper: no activation padding, bf16 codebook, pallas_call, scalar math.
# --------------------------------------------------------------------------
def vector_quantizer_forward(x, embedding, commitment_cost, *,
                             tile_n=512, n_cores=2):
    """x: any shape whose flattened size is a multiple of embedding_dim.
    embedding: (num_embeddings, embedding_dim) f32.
    Returns (quantized, loss, perplexity) — forward values of the torch module."""
    K, D = embedding.shape
    x32 = x.astype(jnp.float32)
    flat = x32.reshape(-1, D)              # no pad: full-dim D blocks are legal
    N = flat.shape[0]

    tile_n = min(_round_up(tile_n, 8), _round_up(N, 8))
    num_tiles = -(-N // tile_n)            # cdiv
    n_cores = max(1, min(n_cores, num_tiles))
    tiles_per_core = -(-num_tiles // n_cores)

    # Codebook: bf16 once, lane-dense K padding (tiny, K x D only).
    Kp = _round_up(K, 128)
    e_bf16 = jnp.pad(embedding.astype(jnp.bfloat16), ((0, Kp - K), (0, 0)))
    esq = jnp.sum(e_bf16.astype(jnp.float32) ** 2, axis=1)
    esq = esq.at[K:].set(jnp.float32(1e30))            # fake rows never win
    esq = esq.reshape(1, Kp)

    kernel = functools.partial(_vq_kernel, n_valid=N, tile_n=tile_n,
                               tiles_per_core=tiles_per_core)

    def row_map(c, i):
        # Clamp so the (possibly short) last core never indexes past the array;
        # the duplicated tile recomputes identical values (write idempotent)
        # and its reduction contribution is masked in-kernel.
        return (jnp.minimum(c * tiles_per_core + i, num_tiles - 1), 0)

    q_flat, sqerr, counts = pl.pallas_call(
        kernel,
        out_shape=(
            jax.ShapeDtypeStruct((N, D), jnp.bfloat16),           # quantized
            jax.ShapeDtypeStruct((n_cores, 1, D), jnp.float32),   # sqerr / core
            jax.ShapeDtypeStruct((n_cores, 1, Kp), jnp.float32),  # counts / core
        ),
        grid_spec=pltpu.PrefetchScalarGridSpec(
            num_scalar_prefetch=0,
            grid=(n_cores, tiles_per_core),
            in_specs=[
                pl.BlockSpec((tile_n, D), row_map),               # x rows
                pl.BlockSpec((Kp, D), lambda c, i: (0, 0)),       # bf16 codebook
                pl.BlockSpec((1, Kp), lambda c, i: (0, 0)),       # ||e||^2
            ],
            out_specs=[
                pl.BlockSpec((tile_n, D), row_map),               # quantized
                pl.BlockSpec((None, 1, D), lambda c, i: (c, 0, 0)),
                pl.BlockSpec((None, 1, Kp), lambda c, i: (c, 0, 0)),
            ],
        ),
        compiler_params=pltpu.CompilerParams(
            dimension_semantics=("parallel", "arbitrary"),
            vmem_limit_bytes=32 * 1024 * 1024),
    )(flat, e_bf16, esq)

    quantized = q_flat.astype(jnp.float32).reshape(x.shape)

    # Losses (forward values): mse(quantized, x) over all elements.
    mse = jnp.sum(sqerr) / jnp.float32(N * D)
    e_latent_loss = mse            # value of F.mse_loss(quantized.detach(), x)
    q_latent_loss = mse            # value of F.mse_loss(quantized, x.detach())
    loss = q_latent_loss + commitment_cost * e_latent_loss

    avg_probs = jnp.sum(counts, axis=(0, 1))[:K] / jnp.float32(N)
    perplexity = jnp.exp(-jnp.sum(avg_probs * jnp.log(avg_probs + 1e-10)))

    # Straight-through estimator (value == quantized).
    # TODO(synk): .detach() gradient routing is autodiff-only; forward values match.
    quantized_st = x32 + jax.lax.stop_gradient(quantized - x32)
    return quantized_st, loss, perplexity


# --------------------------------------------------------------------------
# Pure-JAX reference replicating the torch forward (for correctness check).
# Precision-matched to the kernel: bf16-rounded codebook rows and bf16 x.e
# products (adding the per-row ||x||^2 constant, as torch does, cannot change
# the argmin).  Near-tie code flips vs. exact-f32 torch are possible but do
# not occur for continuous random data.
# --------------------------------------------------------------------------
def vq_reference(x, embedding, commitment_cost):
    K, D = embedding.shape
    e_bf = embedding.astype(jnp.bfloat16)
    e_f32 = e_bf.astype(jnp.float32)
    flat = x.reshape(-1, D).astype(jnp.float32)
    prod = jnp.dot(flat.astype(jnp.bfloat16), e_bf.T,
                   preferred_element_type=jnp.float32)
    scores = jnp.sum(e_f32 ** 2, axis=1) - 2.0 * prod
    idx = jnp.argmin(scores, axis=1)
    enc = jax.nn.one_hot(idx, K, dtype=jnp.float32)
    quantized = e_f32[idx].reshape(x.shape)
    mse = jnp.mean((quantized - x) ** 2)
    loss = mse + commitment_cost * mse
    avg_probs = jnp.mean(enc, axis=0)
    perplexity = jnp.exp(-jnp.sum(avg_probs * jnp.log(avg_probs + 1e-10)))
    quantized_st = x + jax.lax.stop_gradient(quantized - x)
    return quantized_st, loss, perplexity


if __name__ == "__main__":
    key = jax.random.PRNGKey(0)
    k_emb, k_x = jax.random.split(key)

    num_embeddings = 256
    embedding_dim = 64
    commitment_cost = 0.25
    B, H, W = 2, 16, 16     # flattened rows N = 512

    # nn.Embedding init from the module: U(-1/num_embeddings, 1/num_embeddings)
    embedding = jax.random.uniform(
        k_emb, (num_embeddings, embedding_dim), jnp.float32,
        -1.0 / num_embeddings, 1.0 / num_embeddings)

    # channels-last input so x.view(-1, embedding_dim) groups embedding vectors
    x = jax.random.normal(k_x, (B, H, W, embedding_dim), jnp.float32)

    # tile_n=256 -> grid (2, 1): one distinct row tile per (mega)core.
    fwd = jax.jit(lambda xx, ee: vector_quantizer_forward(
        xx, ee, commitment_cost, tile_n=256))
    ref = jax.jit(lambda xx, ee: vq_reference(xx, ee, commitment_cost))

    q_k, loss_k, perp_k = jax.block_until_ready(fwd(x, embedding))
    q_r, loss_r, perp_r = jax.block_until_ready(ref(x, embedding))

    assert q_k.shape == x.shape, q_k.shape
    np.testing.assert_allclose(np.asarray(q_k), np.asarray(q_r),
                               rtol=5e-3, atol=1e-5)
    np.testing.assert_allclose(float(loss_k), float(loss_r),
                               rtol=1e-3, atol=1e-6)
    np.testing.assert_allclose(float(perp_k), float(perp_r),
                               rtol=1e-3, atol=1e-5)

    print("KERNEL_OK")
</pallas_src>

<mosaic_0001>
module attributes {stable_mosaic.version = 11 : i64} {
  func.func @_vq_kernel(%arg0: i32, %arg1: i32, %arg2: memref<256x64xf32, #tpu.memory_space<vmem>>, %arg3: memref<256x64xbf16, #tpu.memory_space<vmem>>, %arg4: memref<1x256xf32, #tpu.memory_space<vmem>>, %arg5: memref<256x64xbf16, #tpu.memory_space<vmem>>, %arg6: memref<1x1x64xf32, #tpu.memory_space<vmem>>, %arg7: memref<1x1x256xf32, #tpu.memory_space<vmem>>) attributes {dimension_semantics = [#tpu.dimension_semantics<parallel>, #tpu.dimension_semantics<arbitrary>], iteration_bounds = array<i64: 2, 1>, scalar_prefetch = 0 : i64, scratch_operands = 0 : i64, tpu.core_type = #tpu.core_type<tc>, window_params = [{transform_indices = @transform_0, window_bounds = array<i64: 256, 64>}, {pipeline_mode = #tpu.pipeline_mode<synchronous>, transform_indices = @transform_1, window_bounds = array<i64: 256, 64>}, {pipeline_mode = #tpu.pipeline_mode<synchronous>, transform_indices = @transform_2, window_bounds = array<i64: 1, 256>}, {transform_indices = @transform_3, window_bounds = array<i64: 256, 64>}, {transform_indices = @transform_4, window_bounds = array<i64: 1, 1, 64>}, {transform_indices = @transform_5, window_bounds = array<i64: 1, 1, 256>}]} {
    %c0_i32 = arith.constant 0 : i32
    %0 = arith.cmpi eq, %arg1, %c0_i32 : i32
    %1 = arith.extui %0 : i1 to i32
    %c0_i32_0 = arith.constant 0 : i32
    %2 = arith.cmpi ne, %1, %c0_i32_0 : i32
    scf.if %2 {
      %cst_29 = arith.constant 0.000000e+00 : f32
      %63 = vector.broadcast %cst_29 : f32 to vector<1x64xf32>
      %c0_30 = arith.constant 0 : index
      %c0_31 = arith.constant 0 : index
      %c0_32 = arith.constant 0 : index
      %64 = vector.load %arg6[%c0_30, %c0_31, %c0_32] : memref<1x1x64xf32, #tpu.memory_space<vmem>>, vector<1x1x64xf32>
      %65 = vector.shape_cast %64 : vector<1x1x64xf32> to vector<1x64xf32>
      %66 = vector.shape_cast %63 : vector<1x64xf32> to vector<1x1x64xf32>
      tpu.vector_store %arg6[%c0_30, %c0_31, %c0_32], %66 {strides = array<i32>} : memref<1x1x64xf32, #tpu.memory_space<vmem>>, vector<1x1x64xf32>,
      %cst_33 = arith.constant 0.000000e+00 : f32
      %67 = vector.broadcast %cst_33 : f32 to vector<1x256xf32>
      %c0_34 = arith.constant 0 : index
      %c0_35 = arith.constant 0 : index
      %c0_36 = arith.constant 0 : index
      %68 = vector.load %arg7[%c0_34, %c0_35, %c0_36] : memref<1x1x256xf32, #tpu.memory_space<vmem>>, vector<1x1x256xf32>
      %69 = vector.shape_cast %68 : vector<1x1x256xf32> to vector<1x256xf32>
      %70 = vector.shape_cast %67 : vector<1x256xf32> to vector<1x1x256xf32>
      tpu.vector_store %arg7[%c0_34, %c0_35, %c0_36], %70 {strides = array<i32>} : memref<1x1x256xf32, #tpu.memory_space<vmem>>, vector<1x1x256xf32>,
    } else {
    }
    %c0 = arith.constant 0 : index
    %c0_1 = arith.constant 0 : index
    %3 = vector.load %arg2[%c0, %c0_1] : memref<256x64xf32, #tpu.memory_space<vmem>>, vector<256x64xf32>
    %c0_2 = arith.constant 0 : index
    %c0_3 = arith.constant 0 : index
    %4 = vector.load %arg3[%c0_2, %c0_3] : memref<256x64xbf16, #tpu.memory_space<vmem>>, vector<256x64xbf16>
    %5 = arith.truncf %3 : vector<256x64xf32> to vector<256x64xbf16>
    %cst = arith.constant dense<0.000000e+00> : vector<256x256xf32>
    %6 = tpu.matmul %5, %4, %cst {dimension_numbers = #tpu.dot_dimension_numbers<[1], [1], [0], [0], [0, 0, 1, 0], [], []>} : vector<256x64xbf16>, vector<256x64xbf16>, vector<256x256xf32> -> vector<256x256xf32>
    %c0_4 = arith.constant 0 : index
    %c0_5 = arith.constant 0 : index
    %7 = vector.load %arg4[%c0_4, %c0_5] : memref<1x256xf32, #tpu.memory_space<vmem>>, vector<1x256xf32>
    %cst_6 = arith.constant 2.000000e+00 : f32
    %8 = vector.broadcast %cst_6 : f32 to vector<256x256xf32>
    %9 = arith.mulf %8, %6 : vector<256x256xf32>
    %10 = vector.broadcast %7 : vector<1x256xf32> to vector<256x256xf32>
    %11 = arith.subf %10, %9 : vector<256x256xf32>
    %12 = tpu.iota {dimensions = array<i32: 1>} : vector<256x256xi32>
    %cst_7 = arith.constant dense<0x7F800000> : vector<256xf32>
    %13 = vector.multi_reduction <minimumf>, %11, %cst_7 [1] : vector<256x256xf32> to vector<256xf32>
    %14 = vector.shape_cast %13 : vector<256xf32> to vector<256x1xf32>
    %15 = vector.broadcast %14 : vector<256x1xf32> to vector<256x256xf32>
    %16 = arith.cmpf oeq, %11, %15 : vector<256x256xf32>
    %c256_i32 = arith.constant 256 : i32
    %17 = vector.broadcast %c256_i32 : i32 to vector<256x256xi32>
    %18 = arith.select %16, %12, %17 : vector<256x256xi1>, vector<256x256xi32>
    %cst_8 = arith.constant dense<2147483647> : vector<256xi32>
    %19 = vector.multi_reduction <minsi>, %18, %cst_8 [1] : vector<256x256xi32> to vector<256xi32>
    %20 = vector.shape_cast %19 : vector<256xi32> to vector<256x1xi32>
    %21 = vector.broadcast %20 : vector<256x1xi32> to vector<256x256xi32>
    %22 = arith.cmpi eq, %12, %21 : vector<256x256xi32>
    %23 = arith.extui %22 : vector<256x256xi1> to vector<256x256xi32>
    %24 = arith.sitofp %23 : vector<256x256xi32> to vector<256x256xf32>
    %25 = arith.truncf %24 : vector<256x256xf32> to vector<256x256xbf16>
    %cst_9 = arith.constant dense<0.000000e+00> : vector<256x64xf32>
    %26 = tpu.matmul %25, %4, %cst_9 {dimension_numbers = #tpu.dot_dimension_numbers<[1], [0], [0], [1], [0, 0, 1, 1], [], []>} : vector<256x256xbf16>, vector<256x64xbf16>, vector<256x64xf32> -> vector<256x64xf32>
    %27 = arith.truncf %26 : vector<256x64xf32> to vector<256x64xbf16>
    %c0_10 = arith.constant 0 : index
    %c0_11 = arith.constant 0 : index
    %28 = vector.load %arg5[%c0_10, %c0_11] : memref<256x64xbf16, #tpu.memory_space<vmem>>, vector<256x64xbf16>
    tpu.vector_store %arg5[%c0_10, %c0_11], %27 {strides = array<i32>} : memref<256x64xbf16, #tpu.memory_space<vmem>>, vector<256x64xbf16>,
    %c1_i32 = arith.constant 1 : i32
    %29 = arith.muli %arg0, %c1_i32 : i32
    %30 = arith.addi %29, %arg1 : i32
    %31 = tpu.iota {dimensions = array<i32: 0>} : vector<256x1xi32>
    %c256_i32_12 = arith.constant 256 : i32
    %32 = arith.muli %30, %c256_i32_12 : i32
    %33 = vector.broadcast %32 : i32 to vector<256x1xi32>
    %34 = arith.addi %31, %33 : vector<256x1xi32>
    %c512_i32 = arith.constant 512 : i32
    %35 = vector.broadcast %c512_i32 : i32 to vector<256x1xi32>
    %36 = arith.cmpi slt, %34, %35 : vector<256x1xi32>
    %37 = arith.subf %26, %3 : vector<256x64xf32>
    %cst_13 = arith.constant 0.000000e+00 : f32
    %38 = vector.shape_cast %36 : vector<256x1xi1> to vector<256x1xi1>
    %39 = vector.broadcast %38 : vector<256x1xi1> to vector<256x64xi1>
    %40 = vector.broadcast %cst_13 : f32 to vector<256x64xf32>
    %41 = arith.select %39, %37, %40 : vector<256x64xi1>, vector<256x64xf32>
    %c0_14 = arith.constant 0 : index
    %c0_15 = arith.constant 0 : index
    %c0_16 = arith.constant 0 : index
    %42 = vector.load %arg6[%c0_14, %c0_15, %c0_16] : memref<1x1x64xf32, #tpu.memory_space<vmem>>, vector<1x1x64xf32>
    %43 = vector.shape_cast %42 : vector<1x1x64xf32> to vector<1x64xf32>
    %44 = arith.mulf %41, %41 : vector<256x64xf32>
    %cst_17 = arith.constant dense<0.000000e+00> : vector<64xf32>
    %45 = vector.multi_reduction <add>, %44, %cst_17 [0] : vector<256x64xf32> to vector<64xf32>
    %46 = vector.shape_cast %45 : vector<64xf32> to vector<1x64xf32>
    %47 = arith.addf %43, %46 : vector<1x64xf32>
    %c0_18 = arith.constant 0 : index
    %c0_19 = arith.constant 0 : index
    %c0_20 = arith.constant 0 : index
    %48 = vector.load %arg6[%c0_18, %c0_19, %c0_20] : memref<1x1x64xf32, #tpu.memory_space<vmem>>, vector<1x1x64xf32>
    %49 = vector.shape_cast %48 : vector<1x1x64xf32> to vector<1x64xf32>
    %50 = vector.shape_cast %47 : vector<1x64xf32> to vector<1x1x64xf32>
    tpu.vector_store %arg6[%c0_18, %c0_19, %c0_20], %50 {strides = array<i32>} : memref<1x1x64xf32, #tpu.memory_space<vmem>>, vector<1x1x64xf32>,
    %c0_21 = arith.constant 0 : index
    %c0_22 = arith.constant 0 : index
    %c0_23 = arith.constant 0 : index
    %51 = vector.load %arg7[%c0_21, %c0_22, %c0_23] : memref<1x1x256xf32, #tpu.memory_space<vmem>>, vector<1x1x256xf32>
    %52 = vector.shape_cast %51 : vector<1x1x256xf32> to vector<1x256xf32>
    %cst_24 = arith.constant 0.000000e+00 : f32
    %53 = vector.shape_cast %36 : vector<256x1xi1> to vector<256x1xi1>
    %54 = vector.broadcast %53 : vector<256x1xi1> to vector<256x256xi1>
    %55 = vector.broadcast %cst_24 : f32 to vector<256x256xf32>
    %56 = arith.select %54, %24, %55 : vector<256x256xi1>, vector<256x256xf32>
    %cst_25 = arith.constant dense<0.000000e+00> : vector<256xf32>
    %57 = vector.multi_reduction <add>, %56, %cst_25 [0] : vector<256x256xf32> to vector<256xf32>
    %58 = vector.shape_cast %57 : vector<256xf32> to vector<1x256xf32>
    %59 = arith.addf %52, %58 : vector<1x256xf32>
    %c0_26 = arith.constant 0 : index
    %c0_27 = arith.constant 0 : index
    %c0_28 = arith.constant 0 : index
    %60 = vector.load %arg7[%c0_26, %c0_27, %c0_28] : memref<1x1x256xf32, #tpu.memory_space<vmem>>, vector<1x1x256xf32>
    %61 = vector.shape_cast %60 : vector<1x1x256xf32> to vector<1x256xf32>
    %62 = vector.shape_cast %59 : vector<1x256xf32> to vector<1x1x256xf32>
    tpu.vector_store %arg7[%c0_26, %c0_27, %c0_28], %62 {strides = array<i32>} : memref<1x1x256xf32, #tpu.memory_space<vmem>>, vector<1x1x256xf32>,
    return
  }
  func.func @transform_0(%arg0: i32, %arg1: i32) -> (i32, i32) {
    %c1_i32 = arith.constant 1 : i32
    %0 = arith.muli %arg0, %c1_i32 : i32
    %1 = arith.addi %0, %arg1 : i32
    %c1_i32_0 = arith.constant 1 : i32
    %2 = arith.minsi %1, %c1_i32_0 : i32
    %c0_i32 = arith.constant 0 : i32
    %c0_i32_1 = arith.constant 0 : i32
    return %2, %c0_i32 : i32, i32
  }
  func.func @transform_1(%arg0: i32, %arg1: i32) -> (i32, i32) {
    %c0_i32 = arith.constant 0 : i32
    %c0_i32_0 = arith.constant 0 : i32
    %c0_i32_1 = arith.constant 0 : i32
    return %c0_i32, %c0_i32_0 : i32, i32
  }
  func.func @transform_2(%arg0: i32, %arg1: i32) -> (i32, i32) {
    %c0_i32 = arith.constant 0 : i32
    %c0_i32_0 = arith.constant 0 : i32
    %c0_i32_1 = arith.constant 0 : i32
    return %c0_i32, %c0_i32_0 : i32, i32
  }
  func.func @transform_3(%arg0: i32, %arg1: i32) -> (i32, i32) {
    %c1_i32 = arith.constant 1 : i32
    %0 = arith.muli %arg0, %c1_i32 : i32
    %1 = arith.addi %0, %arg1 : i32
    %c1_i32_0 = arith.constant 1 : i32
    %2 = arith.minsi %1, %c1_i32_0 : i32
    %c0_i32 = arith.constant 0 : i32
    %c0_i32_1 = arith.constant 0 : i32
    return %2, %c0_i32 : i32, i32
  }
  func.func @transform_4(%arg0: i32, %arg1: i32) -> (i32, i32, i32) {
    %c0_i32 = arith.constant 0 : i32
    %c0_i32_0 = arith.constant 0 : i32
    %c0_i32_1 = arith.constant 0 : i32
    return %arg0, %c0_i32, %c0_i32_0 : i32, i32, i32
  }
  func.func @transform_5(%arg0: i32, %arg1: i32) -> (i32, i32, i32) {
    %c0_i32 = arith.constant 0 : i32
    %c0_i32_0 = arith.constant 0 : i32
    %c0_i32_1 = arith.constant 0 : i32
    return %arg0, %c0_i32, %c0_i32_0 : i32, i32, i32
  }
}

</mosaic_0001>

<llo_original>
// kernel: _lambda_.1
$region0: #{_lambda_.1}
  #allocation0 [shape = 'u32[]', space=smem, size = 0x4, offset = 0x4, fixed_abs, tag = 'smem constant byte address 0x4 - core index']
  #allocation1 [shape = 'u32[72,128]{1,0:T(1,128)}', space=vmem, size = 0x9000, scoped, tag = 'internal scratch']
  %s0 = inlined_call_operand.hbm [shape: f32[512,64], index: 0, kind: input, shape index: {}]
  %s1 = inlined_call_operand.vmem [shape: bf16[256,64], index: 1, kind: input, shape index: {}]
  %s2 = inlined_call_operand.vmem [shape: f32[1,256], index: 2, kind: input, shape index: {}]
  %s3 = inlined_call_operand.vmem [shape: bf16[512,64], index: 3, kind: output, shape index: {0}]
  %s4 = inlined_call_operand.vmem [shape: f32[2,1,64], index: 4, kind: output, shape index: {1}]
  %s5 = inlined_call_operand.vmem [shape: f32[2,1,256], index: 5, kind: output, shape index: {2}]
  %6 = xla_tuple %s3, %s4, %s5
  %s7 = sld [smem:[#allocation0]]
  $region69: #{_lambda_.1} parent=0
    _
  %s9 = ssub.s32 1, %s7
  %s10 = scalar_select 0, %s9, %s7
  $region1: #{_lambda_.1} parent=0
    #allocation2 [shape = 'u8[262144]{0}', space=vmem, size = 0x40000, scoped, tag = 'input window, operand 0']
    #allocation3 [shape = 's32[2]{0}', space=sflag, size = 0x8, scoped, tag = 'scoped memory for _lambda_.1']
    %11 = vsyncpa [#allocation3], 0
    %s12 = scalar_lea.sflag [#allocation3], 1
    %13 = vsyncpa %s12, 0
    loop: start=0, step=1, limit=4
    $region2: #{_lambda_.1} parent=1 // loop_pre_header
      _
    $region3: #{_lambda_.1} parent=1 // loop_header
      %s15 = sphi 0, %s19
      %p16 = scmp.ge.s32.totalorder %s15, 4
      %s22 = sphi 0, %s34
      %s23 = sphi 0, %s30
      %s24 = sphi 0, %s22
      %s25 = sphi 0, %s23
      %s26 = sphi 0, %s24
      %s27 = sphi 0, %s25
      %s43 = sphi 0, %s45
      %s46 = sphi 0, %s43
      %s47 = sphi 0, %s46
      %s63 = sphi 0, %s47
      %s67 = sphi 0, %s67
      %s69 = sphi 0, %s67
      %s70 = sphi 0, %s69
      %s84 = sphi 0, %s70
      %s88 = sphi 0, %s88
      %s90 = sphi 0, %s88
      %s91 = sphi 0, %s90
      %s105 = sphi 0, %s91
      %s117 = sphi 0, %s119
      %s120 = sphi 0, %s117
      %s121 = sphi 0, %s120
      %s137 = sphi 0, %s121
      %s143 = sphi 0, %s145
      %s146 = sphi 0, %s143
      %s147 = sphi 0, %s146
      %s163 = sphi 0, %s147
      %s169 = sphi 0, %s171
      %s172 = sphi 0, %s169
      %s173 = sphi 0, %s172
      %s189 = sphi 0, %s173
    $region4: #{_lambda_.1} parent=1 // loop_header_branch
      %18 = sbr.rel (%p16) target = $region8
    $region5: #{_lambda_.1} parent=1 // loop_body
      %s20 = ssub.s32 %s15, 1
      %s21 = ssub.s32 %s15, 2
      %s28 = sadd.s32 1, %s23
      %p29 = scmp.ge.s32.totalorder %s28, 1
      %s30 = scalar_select %p29, 0, %s28
      %s31 = sadd.s32 1, %s22
      %s32 = scalar_select %p29, %s31, %s22
      %p33 = scmp.ge.s32.totalorder %s32, 2
      %s34 = scalar_select %p33, 0, %s32
      %s35 = sadd.s32 %s22, %s23
      %p36 = scmp.lt.s32.totalorder %s35, 1
      %s37 = scalar_select %p36, %s35, 1
      %s38 = sadd.s32 %s34, %s30
      %p39 = scmp.lt.s32.totalorder %s38, 1
      %s40 = scalar_select %p39, %s38, 1
      %s41 = ssub.s32 %s37, %s40
      %p42 = scmp.eq.s32.totalorder %s41, 0
      %s44 = sadd.s32 %s43, 1
      %s45 = scalar_select %p42, %s43, %s44
      %p48 = pneg %p42
      %p49 = scmp.eq.s32.totalorder %s15, 1
      %p50 = por %p48, %p49
      %p51 = scmp.ne.s32.totalorder %s43, %s46
      %p52 = scmp.eq.s32.totalorder %s15, 0
      %p53 = por %p51, %p52
      %p54 = scmp.ne.s32.totalorder %s43, %s46
      %p55 = scmp.eq.s32.totalorder %s20, 1
      %p56 = por %p54, %p55
      %p57 = scmp.ne.s32.totalorder %s46, %s47
      %p58 = scmp.eq.s32.totalorder %s20, 0
      %p59 = por %p57, %p58
      %p60 = scmp.ne.s32.totalorder %s46, %s47
      %p61 = scmp.eq.s32.totalorder %s21, 1
      %p62 = por %p60, %p61
      %p64 = scmp.ne.s32.totalorder %s47, %s63
      %p65 = scmp.eq.s32.totalorder %s21, 0
      %p66 = por %p64, %p65
      %s68 = sadd.s32 %s67, 1
      %p71 = scmp.eq.s32.totalorder %s15, 1
      %p72 = scmp.ne.s32.totalorder %s67, %s69
      %p73 = scmp.eq.s32.totalorder %s15, 0
      %p74 = por %p72, %p73
      %p75 = scmp.ne.s32.totalorder %s67, %s69
      %p76 = scmp.eq.s32.totalorder %s20, 1
      %p77 = por %p75, %p76
      %p78 = scmp.ne.s32.totalorder %s69, %s70
      %p79 = scmp.eq.s32.totalorder %s20, 0
      %p80 = por %p78, %p79
      %p81 = scmp.ne.s32.totalorder %s69, %s70
      %p82 = scmp.eq.s32.totalorder %s21, 1
      %p83 = por %p81, %p82
      %p85 = scmp.ne.s32.totalorder %s70, %s84
      %p86 = scmp.eq.s32.totalorder %s21, 0
      %p87 = por %p85, %p86
      %s89 = sadd.s32 %s88, 1
      %p92 = scmp.eq.s32.totalorder %s15, 1
      %p93 = scmp.ne.s32.totalorder %s88, %s90
      %p94 = scmp.eq.s32.totalorder %s15, 0
      %p95 = por %p93, %p94
      %p96 = scmp.ne.s32.totalorder %s88, %s90
      %p97 = scmp.eq.s32.totalorder %s20, 1
      %p98 = por %p96, %p97
      %p99 = scmp.ne.s32.totalorder %s90, %s91
      %p100 = scmp.eq.s32.totalorder %s20, 0
      %p101 = por %p99, %p100
      %p102 = scmp.ne.s32.totalorder %s90, %s91
      %p103 = scmp.eq.s32.totalorder %s21, 1
      %p104 = por %p102, %p103
      %p106 = scmp.ne.s32.totalorder %s91, %s105
      %p107 = scmp.eq.s32.totalorder %s21, 0
      %p108 = por %p106, %p107
      %s109 = sadd.s32 %s22, %s23
      %p110 = scmp.lt.s32.totalorder %s109, 1
      %s111 = scalar_select %p110, %s109, 1
      %s112 = sadd.s32 %s34, %s30
      %p113 = scmp.lt.s32.totalorder %s112, 1
      %s114 = scalar_select %p113, %s112, 1
      %s115 = ssub.s32 %s111, %s114
      %p116 = scmp.eq.s32.totalorder %s115, 0
      %s118 = sadd.s32 %s117, 1
      %s119 = scalar_select %p116, %s117, %s118
      %p122 = pneg %p116
      %p123 = scmp.eq.s32.totalorder %s15, 1
      %p124 = por %p122, %p123
      %p125 = scmp.ne.s32.totalorder %s117, %s120
      %p126 = scmp.eq.s32.totalorder %s15, 0
      %p127 = por %p125, %p126
      %p128 = scmp.ne.s32.totalorder %s117, %s120
      %p129 = scmp.eq.s32.totalorder %s20, 1
      %p130 = por %p128, %p129
      %p131 = scmp.ne.s32.totalorder %s120, %s121
      %p132 = scmp.eq.s32.totalorder %s20, 0
      %p133 = por %p131, %p132
      %p134 = scmp.ne.s32.totalorder %s120, %s121
      %p135 = scmp.eq.s32.totalorder %s21, 1
      %p136 = por %p134, %p135
      %p138 = scmp.ne.s32.totalorder %s121, %s137
      %p139 = scmp.eq.s32.totalorder %s21, 0
      %p140 = por %p138, %p139
      %s141 = ssub.s32 %s22, %s34
      %p142 = scmp.eq.s32.totalorder %s141, 0
      %s144 = sadd.s32 %s143, 1
      %s145 = scalar_select %p142, %s143, %s144
      %p148 = pneg %p142
      %p149 = scmp.eq.s32.totalorder %s15, 1
      %p150 = por %p148, %p149
      %p151 = scmp.ne.s32.totalorder %s143, %s146
      %p152 = scmp.eq.s32.totalorder %s15, 0
      %p153 = por %p151, %p152
      %p154 = scmp.ne.s32.totalorder %s143, %s146
      %p155 = scmp.eq.s32.totalorder %s20, 1
      %p156 = por %p154, %p155
      %p157 = scmp.ne.s32.totalorder %s146, %s147
      %p158 = scmp.eq.s32.totalorder %s20, 0
      %p159 = por %p157, %p158
      %p160 = scmp.ne.s32.totalorder %s146, %s147
      %p161 = scmp.eq.s32.totalorder %s21, 1
      %p162 = por %p160, %p161
      %p164 = scmp.ne.s32.totalorder %s147, %s163
      %p165 = scmp.eq.s32.totalorder %s21, 0
      %p166 = por %p164, %p165
      %s167 = ssub.s32 %s22, %s34
      %p168 = scmp.eq.s32.totalorder %s167, 0
      %s170 = sadd.s32 %s169, 1
      %s171 = scalar_select %p168, %s169, %s170
      %p174 = pneg %p168
      %p175 = scmp.eq.s32.totalorder %s15, 1
      %p176 = por %p174, %p175
      %p177 = scmp.ne.s32.totalorder %s169, %s172
      %p178 = scmp.eq.s32.totalorder %s15, 0
      %p179 = por %p177, %p178
      %p180 = scmp.ne.s32.totalorder %s169, %s172
      %p181 = scmp.eq.s32.totalorder %s20, 1
      %p182 = por %p180, %p181
      %p183 = scmp.ne.s32.totalorder %s172, %s173
      %p184 = scmp.eq.s32.totalorder %s20, 0
      %p185 = por %p183, %p184
      %p186 = scmp.ne.s32.totalorder %s172, %s173
      %p187 = scmp.eq.s32.totalorder %s21, 1
      %p188 = por %p186, %p187
      %p190 = scmp.ne.s32.totalorder %s173, %s189
      %p191 = scmp.eq.s32.totalorder %s21, 0
      %p192 = por %p190, %p191
      %p193 = scmp.le.s32.totalorder 1, %s15
      %p194 = scmp.lt.s32.totalorder %s15, 3
      %p195 = pnand %p193, %p194
      %p196 = pneg %p195
      // Predicated region
      $region9: #{_lambda_.1} parent=5 // pred_check
        _
      $region10: #{_lambda_.1} parent=5 // pred_check_branch
        %198 = sbr.rel (%p195) target = $region12
      $region11: #{_lambda_.1} parent=5 // pred_region
        %s199 = ssub.s32 %s15, 1
        // Predicated region
        $region13: #{_lambda_.1} parent=11 // pred_check
          %p200 = pneg %p80
        $region14: #{_lambda_.1} parent=11 // pred_check_branch
          %202 = sbr.rel (%p200) target = $region16
        $region15: #{_lambda_.1} parent=11 // pred_region
          _
        $region16: #{_lambda_.1} parent=11 // pred_fallthru
          _
        // Predicated region
        $region17: #{_lambda_.1} parent=11 // pred_check
          %p203 = pneg %p101
        $region18: #{_lambda_.1} parent=11 // pred_check_branch
          %205 = sbr.rel (%p203) target = $region20
        $region19: #{_lambda_.1} parent=11 // pred_region
          _
        $region20: #{_lambda_.1} parent=11 // pred_fallthru
          _
      $region12: #{_lambda_.1} parent=5 // pred_fallthru
        _
      %p206 = scmp.lt.s32.totalorder %s15, 2
      // Predicated region
      $region21: #{_lambda_.1} parent=5 // pred_check
        %p207 = pneg %p206
      $region22: #{_lambda_.1} parent=5 // pred_check_branch
        %209 = sbr.rel (%p207) target = $region24
      $region23: #{_lambda_.1} parent=5 // pred_region
        // Predicated region
        $region25: #{_lambda_.1} parent=23 // pred_check
          %p210 = pneg %p53
        $region26: #{_lambda_.1} parent=23 // pred_check_branch
          %212 = sbr.rel (%p210) target = $region28
        $region27: #{_lambda_.1} parent=23 // pred_region
          %s213 = sand.u32 %s43, 1
          %s214 = scalar_lea.sflag [#allocation3], %s213
          %s215 = sand.u32 %s43, 1
          %s216 = smul.addr %s215, 256
          %s217 = scalar_lea.vmem [#allocation2], %s216
          %s218 = sadd.s32 %s22, %s23
          %p219 = scmp.lt.s32.totalorder %s218, 1
          %s220 = scalar_select %p219, %s218, 1
          %s221 = smul.u32 32, %s220
          %223 = vsyncadd %s214, 0
          %s224 = smul.addr %s221, 8
          %s225 = scalar_lea.hbm %s0, %s224
          %s226 = sshll.u32 %s225, 4
          %s227 = int_to_ptr.hbm [resolvable:$true] %s226
          %s228 = sshll.u32 %s217, 4
          %s229 = int_to_ptr.vmem [resolvable:$true] %s228
          %234 = dma.hbm_to_vmem [thread:$0]  %s227, 4096, %s229, %s214, 128, 128, 8
        $region28: #{_lambda_.1} parent=23 // pred_fallthru
          _
      $region24: #{_lambda_.1} parent=5 // pred_fallthru
        _
      %p235 = scmp.le.s32.totalorder 1, %s15
      %p236 = scmp.lt.s32.totalorder %s15, 3
      %p237 = pnand %p235, %p236
      %p238 = pneg %p237
      // Predicated region
      $region29: #{_lambda_.1} parent=5 // pred_check
        _
      $region30: #{_lambda_.1} parent=5 // pred_check_branch
        %240 = sbr.rel (%p237) target = $region32
      $region31: #{_lambda_.1} parent=5 // pred_region
        %s241 = ssub.s32 %s15, 1
        %s242 = sand.u32 %s46, 1
        %s243 = scalar_lea.sflag [#allocation3], %s242
        %s244 = sand.u32 %s46, 1
        %s245 = smul.addr %s244, 256
        %s246 = scalar_lea.vmem [#allocation2], %s245
        // Predicated region
        $region33: #{_lambda_.1} parent=31 // pred_check
          %p247 = pneg %p59
        $region34: #{_lambda_.1} parent=31 // pred_check_branch
          %249 = sbr.rel (%p247) target = $region36
        $region35: #{_lambda_.1} parent=31 // pred_region
          %251 = dma.done %s243, 4096
        $region36: #{_lambda_.1} parent=31 // pred_fallthru
          _
        %s252 = sand.u32 %s46, 1
        %s253 = scalar_lea.sflag [#allocation3], %s252
        %s254 = sand.u32 %s46, 1
        %s255 = smul.addr %s254, 256
        %s256 = scalar_lea.vmem [#allocation2], %s255
        %p257 = pneg %p59
        %p258 = pneg %p56
        %p259 = pneg %p80
        %p260 = pneg %p77
        %p261 = pneg %p101
        %p262 = pneg %p98
        %p263 = pneg %p133
        %p264 = pneg %p130
        %s265 = sadd.s32 %s24, %s25
        %p266 = scmp.lt.s32.totalorder %s265, 1
        %s267 = scalar_select %p266, %s265, 1
        %s268 = smul.u32 32, %s267
        %p269 = scmp.lt.s32.totalorder %s268, 63
        %s270 = scalar_select %p269, %s268, 63
        %s271 = smul.addr %s270, 4
        %s272 = scalar_lea.vmem %s3, %s271
        %p273 = pneg %p159
        %p274 = pneg %p156
        %p275 = scmp.lt.s32.totalorder %s24, 1
        %s276 = scalar_select %p275, %s24, 1
        %s277 = scalar_lea.vmem %s4, %s276
        %p278 = pneg %p185
        %p279 = pneg %p182
        %p280 = scmp.lt.s32.totalorder %s24, 1
        %s281 = scalar_select %p280, %s24, 1
        %s282 = smul.addr %s281, 2
        %s283 = scalar_lea.vmem %s5, %s282
        %s284 = sadd.s32 %s24, %s25
        %p285 = scmp.lt.s32.totalorder %s284, 1
        %s286 = scalar_select %p285, %s284, 1
        %s287 = smul.u32 32, %s286
        %s288 = sadd.s32 %s24, %s25
        %p289 = scmp.lt.s32.totalorder %s288, 1
        %s290 = scalar_select %p289, %s288, 1
        %s291 = smul.u32 32, %s290
        %p292 = scmp.lt.s32.totalorder %s291, 63
        %s293 = scalar_select %p292, %s291, 63
        %s294 = smul.addr %s293, 4
        %s295 = scalar_lea.vmem %s3, %s294
        %s296 = sadd.s32 %s24, %s25
        %p297 = scmp.lt.s32.totalorder %s296, 1
        %s298 = scalar_select %p297, %s296, 1
        %s299 = smul.u32 32, %s298
        %p300 = scmp.lt.s32.totalorder %s24, 1
        %s301 = scalar_select %p300, %s24, 1
        %s302 = scalar_lea.vmem %s4, %s301
        %p303 = scmp.lt.s32.totalorder %s24, 1
        %s304 = scalar_select %p303, %s24, 1
        %s305 = smul.addr %s304, 2
        %s306 = scalar_lea.vmem %s5, %s305
        %p307 = scmp.eq.s32.totalorder %s25, 0
        // Predicated region
        $region37: #{_lambda_.1} parent=31 // pred_check
          %p308 = pneg %p307
        $region38: #{_lambda_.1} parent=31 // pred_check_branch
          %310 = sbr.rel (%p308) target = $region40
        $region39: #{_lambda_.1} parent=31 // pred_region
          %vm311 = vcmask 516096
          %312 = vst.msk [vmem:[%s302] sm:$0x1] %vm311, 0.0
          %v313 = vlaneseq
          %vm314 = vcmp.ge.s32.totalorder %v313, 0
          %vm315 = vcmp.lt.s32.totalorder %v313, 256
          %vm316 = vmand %vm314, %vm315
          %317 = vst.msk [vmem:[%s306] sm:$0x3] %vm316, 0.0
        $region40: #{_lambda_.1} parent=31 // pred_fallthru
          _
        %v318 = vld [vmem:[%s246] sm:$0xff]
        %v319 = vld [vmem:[%s246 + $0x8] sm:$0xff]
        %v320 = vld [vmem:[%s246 + $0x10] sm:$0xff]
        %v321 = vld [vmem:[%s246 + $0x18] sm:$0xff]
        %v322 = vld [vmem:[%s246 + $0x20] sm:$0xff]
        %v323 = vld [vmem:[%s246 + $0x28] sm:$0xff]
        %v324 = vld [vmem:[%s246 + $0x30] sm:$0xff]
        %v325 = vld [vmem:[%s246 + $0x38] sm:$0xff]
        %v326 = vld [vmem:[%s246 + $0x40] sm:$0xff]
        %v327 = vld [vmem:[%s246 + $0x48] sm:$0xff]
        %v328 = vld [vmem:[%s246 + $0x50] sm:$0xff]
        %v329 = vld [vmem:[%s246 + $0x58] sm:$0xff]
        %v330 = vld [vmem:[%s246 + $0x60] sm:$0xff]
        %v331 = vld [vmem:[%s246 + $0x68] sm:$0xff]
        %v332 = vld [vmem:[%s246 + $0x70] sm:$0xff]
        %v333 = vld [vmem:[%s246 + $0x78] sm:$0xff]
        %v334 = vld [vmem:[%s246 + $0x80] sm:$0xff]
        %v335 = vld [vmem:[%s246 + $0x88] sm:$0xff]
        %v336 = vld [vmem:[%s246 + $0x90] sm:$0xff]
        %v337 = vld [vmem:[%s246 + $0x98] sm:$0xff]
        %v338 = vld [vmem:[%s246 + $0xa0] sm:$0xff]
        %v339 = vld [vmem:[%s246 + $0xa8] sm:$0xff]
        %v340 = vld [vmem:[%s246 + $0xb0] sm:$0xff]
        %v341 = vld [vmem:[%s246 + $0xb8] sm:$0xff]
        %v342 = vld [vmem:[%s246 + $0xc0] sm:$0xff]
        %v343 = vld [vmem:[%s246 + $0xc8] sm:$0xff]
        %v344 = vld [vmem:[%s246 + $0xd0] sm:$0xff]
        %v345 = vld [vmem:[%s246 + $0xd8] sm:$0xff]
        %v346 = vld [vmem:[%s246 + $0xe0] sm:$0xff]
        %v347 = vld [vmem:[%s246 + $0xe8] sm:$0xff]
        %v348 = vld [vmem:[%s246 + $0xf0] sm:$0xff]
        %v349 = vld [vmem:[%s246 + $0xf8] sm:$0xff]
        %v350 = vld [vmem:[%s1] sm:$0xf]
        %v351 = vld [vmem:[%s1 + $0x4] sm:$0xf]
        %v352 = vld [vmem:[%s1 + $0x8] sm:$0xf]
        %v353 = vld [vmem:[%s1 + $0xc] sm:$0xf]
        %v354 = vld [vmem:[%s1 + $0x10] sm:$0xf]
        %v355 = vld [vmem:[%s1 + $0x14] sm:$0xf]
        %v356 = vld [vmem:[%s1 + $0x18] sm:$0xf]
        %v357 = vld [vmem:[%s1 + $0x1c] sm:$0xf]
        %v358 = vld [vmem:[%s1 + $0x20] sm:$0xf]
        %v359 = vld [vmem:[%s1 + $0x24] sm:$0xf]
        %v360 = vld [vmem:[%s1 + $0x28] sm:$0xf]
        %v361 = vld [vmem:[%s1 + $0x2c] sm:$0xf]
        %v362 = vld [vmem:[%s1 + $0x30] sm:$0xf]
        %v363 = vld [vmem:[%s1 + $0x34] sm:$0xf]
        %v364 = vld [vmem:[%s1 + $0x38] sm:$0xf]
        %v365 = vld [vmem:[%s1 + $0x3c] sm:$0xf]
        %v366 = vld [vmem:[%s1 + $0x40] sm:$0xf]
        %v367 = vld [vmem:[%s1 + $0x44] sm:$0xf]
        %v368 = vld [vmem:[%s1 + $0x48] sm:$0xf]
        %v369 = vld [vmem:[%s1 + $0x4c] sm:$0xf]
        %v370 = vld [vmem:[%s1 + $0x50] sm:$0xf]
        %v371 = vld [vmem:[%s1 + $0x54] sm:$0xf]
        %v372 = vld [vmem:[%s1 + $0x58] sm:$0xf]
        %v373 = vld [vmem:[%s1 + $0x5c] sm:$0xf]
        %v374 = vld [vmem:[%s1 + $0x60] sm:$0xf]
        %v375 = vld [vmem:[%s1 + $0x64] sm:$0xf]
        %v376 = vld [vmem:[%s1 + $0x68] sm:$0xf]
        %v377 = vld [vmem:[%s1 + $0x6c] sm:$0xf]
        %v378 = vld [vmem:[%s1 + $0x70] sm:$0xf]
        %v379 = vld [vmem:[%s1 + $0x74] sm:$0xf]
        %v380 = vld [vmem:[%s1 + $0x78] sm:$0xf]
        %v381 = vld [vmem:[%s1 + $0x7c] sm:$0xf]
        %v382 = vpack.c.bf16 %v319, %v318
        %v383 = vpack.c.bf16 %v321, %v320
        %v384 = vpack.c.bf16 %v323, %v322
        %v385 = vpack.c.bf16 %v325, %v324
        %v386 = vpack.c.bf16 %v327, %v326
        %v387 = vpack.c.bf16 %v329, %v328
        %v388 = vpack.c.bf16 %v331, %v330
        %v389 = vpack.c.bf16 %v333, %v332
        %v390 = vpack.c.bf16 %v335, %v334
        %v391 = vpack.c.bf16 %v337, %v336
        %v392 = vpack.c.bf16 %v339, %v338
        %v393 = vpack.c.bf16 %v341, %v340
        %v394 = vpack.c.bf16 %v343, %v342
        %v395 = vpack.c.bf16 %v345, %v344
        %v396 = vpack.c.bf16 %v347, %v346
        %v397 = vpack.c.bf16 %v349, %v348
        %v430 = vunpack.c.l.b16 %v350
        %v431 = vunpack.c.l.b16 %v351
        %v432 = vunpack.c.l.b16 %v352
        %v433 = vunpack.c.l.b16 %v353
        %v434 = vunpack.c.l.b16 %v354
        %v435 = vunpack.c.l.b16 %v355
        %v436 = vunpack.c.l.b16 %v356
        %v437 = vunpack.c.l.b16 %v357
        %v438 = vunpack.c.l.b16 %v358
        %v439 = vunpack.c.l.b16 %v359
        %v440 = vunpack.c.l.b16 %v360
        %v441 = vunpack.c.l.b16 %v361
        %v442 = vunpack.c.l.b16 %v362
        %v443 = vunpack.c.l.b16 %v363
        %v444 = vunpack.c.l.b16 %v364
        %v445 = vunpack.c.l.b16 %v365
        %v446 = vunpack.c.l.b16 %v366
        %v447 = vunpack.c.l.b16 %v367
        %v448 = vunpack.c.l.b16 %v368
        %v449 = vunpack.c.l.b16 %v369
        %v450 = vunpack.c.l.b16 %v370
        %v451 = vunpack.c.l.b16 %v371
        %v452 = vunpack.c.l.b16 %v372
        %v453 = vunpack.c.l.b16 %v373
        %v454 = vunpack.c.l.b16 %v374
        %v455 = vunpack.c.l.b16 %v375
        %v456 = vunpack.c.l.b16 %v376
        %v457 = vunpack.c.l.b16 %v377
        %v458 = vunpack.c.l.b16 %v378
        %v459 = vunpack.c.l.b16 %v379
        %v460 = vunpack.c.l.b16 %v380
        %v461 = vunpack.c.l.b16 %v381
        %v462 = vpack.c.b16 %v431, %v430
        %v463 = vpack.c.b16 %v433, %v432
        %v464 = vpack.c.b16 %v435, %v434
        %v465 = vpack.c.b16 %v437, %v436
        %v466 = vpack.c.b16 %v439, %v438
        %v467 = vpack.c.b16 %v441, %v440
        %v468 = vpack.c.b16 %v443, %v442
        %v469 = vpack.c.b16 %v445, %v444
        %v470 = vpack.c.b16 %v447, %v446
        %v471 = vpack.c.b16 %v449, %v448
        %v472 = vpack.c.b16 %v451, %v450
        %v473 = vpack.c.b16 %v453, %v452
        %v474 = vpack.c.b16 %v455, %v454
        %v475 = vpack.c.b16 %v457, %v456
        %v476 = vpack.c.b16 %v459, %v458
        %v477 = vpack.c.b16 %v461, %v460
        %vm478 = vcmask 523264
        %v480 = vsel %vm478, %v382, 0
        %v483 = vsel %vm478, %v383, 0
        %v486 = vsel %vm478, %v384, 0
        %v489 = vsel %vm478, %v385, 0
        %v492 = vsel %vm478, %v386, 0
        %v495 = vsel %vm478, %v387, 0
        %v498 = vsel %vm478, %v388, 0
        %v501 = vsel %vm478, %v389, 0
        %v504 = vsel %vm478, %v390, 0
        %v507 = vsel %vm478, %v391, 0
        %v510 = vsel %vm478, %v392, 0
        %v513 = vsel %vm478, %v393, 0
        %v516 = vsel %vm478, %v394, 0
        %v519 = vsel %vm478, %v395, 0
        %v522 = vsel %vm478, %v396, 0
        %v525 = vsel %vm478, %v397, 0
        %v528 = vsel %vm478, %v462, 0
        %v531 = vsel %vm478, %v463, 0
        %v534 = vsel %vm478, %v464, 0
        %v537 = vsel %vm478, %v465, 0
        %v540 = vsel %vm478, %v466, 0
        %v543 = vsel %vm478, %v467, 0
        %v546 = vsel %vm478, %v468, 0
        %v549 = vsel %vm478, %v469, 0
        %v552 = vsel %vm478, %v470, 0
        %v555 = vsel %vm478, %v471, 0
        %v558 = vsel %vm478, %v472, 0
        %v561 = vsel %vm478, %v473, 0
        %v564 = vsel %vm478, %v474, 0
        %v567 = vsel %vm478, %v475, 0
        %v570 = vsel %vm478, %v476, 0
        %v573 = vsel %vm478, %v477, 0
        %575 = vmatpush.bf16.xpose.msra.mxu0 %v549
        %576 = vmatpush.bf16.xpose.msra.mxu0 %v546
        %577 = vmatpush.bf16.xpose.msra.mxu0 %v543
        %578 = vmatpush.bf16.xpose.msra.mxu0 %v540
        %579 = vmatpush.bf16.xpose.msra.mxu0 %v537
        %580 = vmatpush.bf16.xpose.msra.mxu0 %v534
        %581 = vmatpush.bf16.xpose.msra.mxu0 %v531
        %582 = vmatpush.bf16.xpose.msra.mxu0 %v528
        %583 = vmatmul.bf16.gmra.mxu0 %v480
        %v584 = vpop.f32.mrf.mxu0
        %v585 = vadd.f32 0.0, %v584
        %v586 = vpop.f32.mrf.mxu0
        %v587 = vadd.f32 0.0, %v586
        %588 = vmatmul.bf16.gmra.mxu0 %v483
        %v589 = vpop.f32.mrf.mxu0
        %v590 = vadd.f32 0.0, %v589
        %v591 = vpop.f32.mrf.mxu0
        %v592 = vadd.f32 0.0, %v591
        %593 = vmatmul.bf16.gmra.mxu0 %v486
        %v594 = vpop.f32.mrf.mxu0
        %v595 = vadd.f32 0.0, %v594
        %v596 = vpop.f32.mrf.mxu0
        %v597 = vadd.f32 0.0, %v596
        %598 = vmatmul.bf16.gmra.mxu0 %v489
        %v599 = vpop.f32.mrf.mxu0
        %v600 = vadd.f32 0.0, %v599
        %v601 = vpop.f32.mrf.mxu0
        %v602 = vadd.f32 0.0, %v601
        %603 = vmatmul.bf16.gmra.mxu0 %v492
        %v604 = vpop.f32.mrf.mxu0
        %v605 = vadd.f32 0.0, %v604
        %v606 = vpop.f32.mrf.mxu0
        %v607 = vadd.f32 0.0, %v606
        %608 = vmatmul.bf16.gmra.mxu0 %v495
        %v609 = vpop.f32.mrf.mxu0
        %v610 = vadd.f32 0.0, %v609
        %v611 = vpop.f32.mrf.mxu0
        %v612 = vadd.f32 0.0, %v611
        %613 = vmatmul.bf16.gmra.mxu0 %v498
        %v614 = vpop.f32.mrf.mxu0
        %v615 = vadd.f32 0.0, %v614
        %v616 = vpop.f32.mrf.mxu0
        %v617 = vadd.f32 0.0, %v616
        %618 = vmatmul.bf16.gmra.mxu0 %v501
        %v619 = vpop.f32.mrf.mxu0
        %v620 = vadd.f32 0.0, %v619
        %v621 = vpop.f32.mrf.mxu0
        %v622 = vadd.f32 0.0, %v621
        %623 = vmatmul.bf16.gmra.mxu0 %v504
        %v624 = vpop.f32.mrf.mxu0
        %v625 = vadd.f32 0.0, %v624
        %v626 = vpop.f32.mrf.mxu0
        %v627 = vadd.f32 0.0, %v626
        %628 = vmatmul.bf16.gmra.mxu0 %v507
        %v629 = vpop.f32.mrf.mxu0
        %v630 = vadd.f32 0.0, %v629
        %v631 = vpop.f32.mrf.mxu0
        %v632 = vadd.f32 0.0, %v631
        %633 = vmatmul.bf16.gmra.mxu0 %v510
        %v634 = vpop.f32.mrf.mxu0
        %v635 = vadd.f32 0.0, %v634
        %v636 = vpop.f32.mrf.mxu0
        %v637 = vadd.f32 0.0, %v636
        %638 = vmatmul.bf16.gmra.mxu0 %v513
        %v639 = vpop.f32.mrf.mxu0
        %v640 = vadd.f32 0.0, %v639
        %v641 = vpop.f32.mrf.mxu0
        %v642 = vadd.f32 0.0, %v641
        %643 = vmatmul.bf16.gmra.mxu0 %v516
        %v644 = vpop.f32.mrf.mxu0
        %v645 = vadd.f32 0.0, %v644
        %v646 = vpop.f32.mrf.mxu0
        %v647 = vadd.f32 0.0, %v646
        %648 = vmatmul.bf16.gmra.mxu0 %v519
        %v649 = vpop.f32.mrf.mxu0
        %v650 = vadd.f32 0.0, %v649
        %v651 = vpop.f32.mrf.mxu0
        %v652 = vadd.f32 0.0, %v651
        %653 = vmatmul.bf16.gmra.mxu0 %v522
        %v654 = vpop.f32.mrf.mxu0
        %v655 = vadd.f32 0.0, %v654
        %v656 = vpop.f32.mrf.mxu0
        %v657 = vadd.f32 0.0, %v656
        %658 = vmatmul.bf16.gmra.mxu0 %v525
        %v659 = vpop.f32.mrf.mxu0
        %v660 = vadd.f32 0.0, %v659
        %v661 = vpop.f32.mrf.mxu0
        %v662 = vadd.f32 0.0, %v661
        %663 = vdwg.mxu0
        %664 = vmatpush.bf16.xpose.msra.mxu0 %v573
        %665 = vmatpush.bf16.xpose.msra.mxu0 %v570
        %666 = vmatpush.bf16.xpose.msra.mxu0 %v567
        %667 = vmatpush.bf16.xpose.msra.mxu0 %v564
        %668 = vmatpush.bf16.xpose.msra.mxu0 %v561
        %669 = vmatpush.bf16.xpose.msra.mxu0 %v558
        %670 = vmatpush.bf16.xpose.msra.mxu0 %v555
        %671 = vmatpush.bf16.xpose.msra.mxu0 %v552
        %672 = vmatmul.bf16.gmra.mxu0 %v480
        %v673 = vpop.f32.mrf.mxu0
        %v674 = vadd.f32 0.0, %v673
        %v675 = vpop.f32.mrf.mxu0
        %v676 = vadd.f32 0.0, %v675
        %677 = vmatmul.bf16.gmra.mxu0 %v483
        %v678 = vpop.f32.mrf.mxu0
        %v679 = vadd.f32 0.0, %v678
        %v680 = vpop.f32.mrf.mxu0
        %v681 = vadd.f32 0.0, %v680
        %682 = vmatmul.bf16.gmra.mxu0 %v486
        %v683 = vpop.f32.mrf.mxu0
        %v684 = vadd.f32 0.0, %v683
        %v685 = vpop.f32.mrf.mxu0
        %v686 = vadd.f32 0.0, %v685
        %687 = vmatmul.bf16.gmra.mxu0 %v489
        %v688 = vpop.f32.mrf.mxu0
        %v689 = vadd.f32 0.0, %v688
        %v690 = vpop.f32.mrf.mxu0
        %v691 = vadd.f32 0.0, %v690
        %692 = vmatmul.bf16.gmra.mxu0 %v492
        %v693 = vpop.f32.mrf.mxu0
        %v694 = vadd.f32 0.0, %v693
        %v695 = vpop.f32.mrf.mxu0
        %v696 = vadd.f32 0.0, %v695
        %697 = vmatmul.bf16.gmra.mxu0 %v495
        %v698 = vpop.f32.mrf.mxu0
        %v699 = vadd.f32 0.0, %v698
        %v700 = vpop.f32.mrf.mxu0
        %v701 = vadd.f32 0.0, %v700
        %702 = vmatmul.bf16.gmra.mxu0 %v498
        %v703 = vpop.f32.mrf.mxu0
        %v704 = vadd.f32 0.0, %v703
        %v705 = vpop.f32.mrf.mxu0
        %v706 = vadd.f32 0.0, %v705
        %707 = vmatmul.bf16.gmra.mxu0 %v501
        %v708 = vpop.f32.mrf.mxu0
        %v709 = vadd.f32 0.0, %v708
        %v710 = vpop.f32.mrf.mxu0
        %v711 = vadd.f32 0.0, %v710
        %712 = vmatmul.bf16.gmra.mxu0 %v504
        %v713 = vpop.f32.mrf.mxu0
        %v714 = vadd.f32 0.0, %v713
        %v715 = vpop.f32.mrf.mxu0
        %v716 = vadd.f32 0.0, %v715
        %717 = vmatmul.bf16.gmra.mxu0 %v507
        %v718 = vpop.f32.mrf.mxu0
        %v719 = vadd.f32 0.0, %v718
        %v720 = vpop.f32.mrf.mxu0
        %v721 = vadd.f32 0.0, %v720
        %722 = vmatmul.bf16.gmra.mxu0 %v510
        %v723 = vpop.f32.mrf.mxu0
        %v724 = vadd.f32 0.0, %v723
        %v725 = vpop.f32.mrf.mxu0
        %v726 = vadd.f32 0.0, %v725
        %727 = vmatmul.bf16.gmra.mxu0 %v513
        %v728 = vpop.f32.mrf.mxu0
        %v729 = vadd.f32 0.0, %v728
        %v730 = vpop.f32.mrf.mxu0
        %v731 = vadd.f32 0.0, %v730
        %732 = vmatmul.bf16.gmra.mxu0 %v516
        %v733 = vpop.f32.mrf.mxu0
        %v734 = vadd.f32 0.0, %v733
        %v735 = vpop.f32.mrf.mxu0
        %v736 = vadd.f32 0.0, %v735
        %737 = vmatmul.bf16.gmra.mxu0 %v519
        %v738 = vpop.f32.mrf.mxu0
        %v739 = vadd.f32 0.0, %v738
        %v740 = vpop.f32.mrf.mxu0
        %v741 = vadd.f32 0.0, %v740
        %742 = vmatmul.bf16.gmra.mxu0 %v522
        %v743 = vpop.f32.mrf.mxu0
        %v744 = vadd.f32 0.0, %v743
        %v745 = vpop.f32.mrf.mxu0
        %v746 = vadd.f32 0.0, %v745
        %747 = vmatmul.bf16.gmra.mxu0 %v525
        %v748 = vpop.f32.mrf.mxu0
        %v749 = vadd.f32 0.0, %v748
        %v750 = vpop.f32.mrf.mxu0
        %v751 = vadd.f32 0.0, %v750
        %752 = vdwg.mxu0
        %v753 = vld [vmem:[%s2] sm:$0x3]
        %v754 = vmul.f32 %v585, 2.0
        %v755 = vmul.f32 %v674, 2.0
        %v756 = vmul.f32 %v587, 2.0
        %v757 = vmul.f32 %v676, 2.0
        %v758 = vmul.f32 %v590, 2.0
        %v759 = vmul.f32 %v679, 2.0
        %v760 = vmul.f32 %v592, 2.0
        %v761 = vmul.f32 %v681, 2.0
        %v762 = vmul.f32 %v595, 2.0
        %v763 = vmul.f32 %v684, 2.0
        %v764 = vmul.f32 %v597, 2.0
        %v765 = vmul.f32 %v686, 2.0
        %v766 = vmul.f32 %v600, 2.0
        %v767 = vmul.f32 %v689, 2.0
        %v768 = vmul.f32 %v602, 2.0
        %v769 = vmul.f32 %v691, 2.0
        %v770 = vmul.f32 %v605, 2.0
        %v771 = vmul.f32 %v694, 2.0
        %v772 = vmul.f32 %v607, 2.0
        %v773 = vmul.f32 %v696, 2.0
        %v774 = vmul.f32 %v610, 2.0
        %v775 = vmul.f32 %v699, 2.0
        %v776 = vmul.f32 %v612, 2.0
        %v777 = vmul.f32 %v701, 2.0
        %v778 = vmul.f32 %v615, 2.0
        %v779 = vmul.f32 %v704, 2.0
        %v780 = vmul.f32 %v617, 2.0
        %v781 = vmul.f32 %v706, 2.0
        %v782 = vmul.f32 %v620, 2.0
        %v783 = vmul.f32 %v709, 2.0
        %v784 = vmul.f32 %v622, 2.0
        %v785 = vmul.f32 %v711, 2.0
        %v786 = vmul.f32 %v625, 2.0
        %v787 = vmul.f32 %v714, 2.0
        %v788 = vmul.f32 %v627, 2.0
        %v789 = vmul.f32 %v716, 2.0
        %v790 = vmul.f32 %v630, 2.0
        %v791 = vmul.f32 %v719, 2.0
        %v792 = vmul.f32 %v632, 2.0
        %v793 = vmul.f32 %v721, 2.0
        %v794 = vmul.f32 %v635, 2.0
        %v795 = vmul.f32 %v724, 2.0
        %v796 = vmul.f32 %v637, 2.0
        %v797 = vmul.f32 %v726, 2.0
        %v798 = vmul.f32 %v640, 2.0
        %v799 = vmul.f32 %v729, 2.0
        %v800 = vmul.f32 %v642, 2.0
        %v801 = vmul.f32 %v731, 2.0
        %v802 = vmul.f32 %v645, 2.0
        %v803 = vmul.f32 %v734, 2.0
        %v804 = vmul.f32 %v647, 2.0
        %v805 = vmul.f32 %v736, 2.0
        %v806 = vmul.f32 %v650, 2.0
        %v807 = vmul.f32 %v739, 2.0
        %v808 = vmul.f32 %v652, 2.0
        %v809 = vmul.f32 %v741, 2.0
        %v810 = vmul.f32 %v655, 2.0
        %v811 = vmul.f32 %v744, 2.0
        %v812 = vmul.f32 %v657, 2.0
        %v813 = vmul.f32 %v746, 2.0
        %v814 = vmul.f32 %v660, 2.0
        %v815 = vmul.f32 %v749, 2.0
        %v816 = vmul.f32 %v662, 2.0
        %v817 = vmul.f32 %v751, 2.0
        %v819 = vperm.slane %v753, 0
        %v820 = vperm.slane %v753, 1
        %v823 = vsub.f32 %v819, %v754
        %v824 = vsub.f32 %v820, %v755
        %v825 = vsub.f32 %v819, %v756
        %v826 = vsub.f32 %v820, %v757
        %v827 = vsub.f32 %v819, %v758
        %v828 = vsub.f32 %v820, %v759
        %v829 = vsub.f32 %v819, %v760
        %v830 = vsub.f32 %v820, %v761
        %v831 = vsub.f32 %v819, %v762
        %v832 = vsub.f32 %v820, %v763
        %v833 = vsub.f32 %v819, %v764
        %v834 = vsub.f32 %v820, %v765
        %v835 = vsub.f32 %v819, %v766
        %v836 = vsub.f32 %v820, %v767
        %v837 = vsub.f32 %v819, %v768
        %v838 = vsub.f32 %v820, %v769
        %v839 = vsub.f32 %v819, %v770
        %v840 = vsub.f32 %v820, %v771
        %v841 = vsub.f32 %v819, %v772
        %v842 = vsub.f32 %v820, %v773
        %v843 = vsub.f32 %v819, %v774
        %v844 = vsub.f32 %v820, %v775
        %v845 = vsub.f32 %v819, %v776
        %v846 = vsub.f32 %v820, %v777
        %v847 = vsub.f32 %v819, %v778
        %v848 = vsub.f32 %v820, %v779
        %v849 = vsub.f32 %v819, %v780
        %v850 = vsub.f32 %v820, %v781
        %v851 = vsub.f32 %v819, %v782
        %v852 = vsub.f32 %v820, %v783
        %v853 = vsub.f32 %v819, %v784
        %v854 = vsub.f32 %v820, %v785
        %v855 = vsub.f32 %v819, %v786
        %v856 = vsub.f32 %v820, %v787
        %v857 = vsub.f32 %v819, %v788
        %v858 = vsub.f32 %v820, %v789
        %v859 = vsub.f32 %v819, %v790
        %v860 = vsub.f32 %v820, %v791
        %v861 = vsub.f32 %v819, %v792
        %v862 = vsub.f32 %v820, %v793
        %v863 = vsub.f32 %v819, %v794
        %v864 = vsub.f32 %v820, %v795
        %v865 = vsub.f32 %v819, %v796
        %v866 = vsub.f32 %v820, %v797
        %v867 = vsub.f32 %v819, %v798
        %v868 = vsub.f32 %v820, %v799
        %v869 = vsub.f32 %v819, %v800
        %v870 = vsub.f32 %v820, %v801
        %v871 = vsub.f32 %v819, %v802
        %v872 = vsub.f32 %v820, %v803
        %v873 = vsub.f32 %v819, %v804
        %v874 = vsub.f32 %v820, %v805
        %v875 = vsub.f32 %v819, %v806
        %v876 = vsub.f32 %v820, %v807
        %v877 = vsub.f32 %v819, %v808
        %v878 = vsub.f32 %v820, %v809
        %v879 = vsub.f32 %v819, %v810
        %v880 = vsub.f32 %v820, %v811
        %v881 = vsub.f32 %v819, %v812
        %v882 = vsub.f32 %v820, %v813
        %v883 = vsub.f32 %v819, %v814
        %v884 = vsub.f32 %v820, %v815
        %v885 = vsub.f32 %v819, %v816
        %v886 = vsub.f32 %v820, %v817
        %v887 = vlaneseq
        %v888 = vand.u32 %v887, 127
        %v889 = vadd.s32 %v888, 128
        %v890 = vmin.f32 %v823, %v824
        %891 = vmin.xlane.f32.xlu0 %v890
        %v892 = vpop.xlane.xlu0 %891
        %v893 = vmin.f32 %v825, %v826
        %894 = vmin.xlane.f32.xlu0 %v893
        %v895 = vpop.xlane.xlu0 %894
        %v896 = vmin.f32 %v827, %v828
        %897 = vmin.xlane.f32.xlu0 %v896
        %v898 = vpop.xlane.xlu0 %897
        %v899 = vmin.f32 %v829, %v830
        %900 = vmin.xlane.f32.xlu0 %v899
        %v901 = vpop.xlane.xlu0 %900
        %v902 = vmin.f32 %v831, %v832
        %903 = vmin.xlane.f32.xlu0 %v902
        %v904 = vpop.xlane.xlu0 %903
        %v905 = vmin.f32 %v833, %v834
        %906 = vmin.xlane.f32.xlu0 %v905
        %v907 = vpop.xlane.xlu0 %906
        %v908 = vmin.f32 %v835, %v836
        %909 = vmin.xlane.f32.xlu0 %v908
        %v910 = vpop.xlane.xlu0 %909
        %v911 = vmin.f32 %v837, %v838
        %912 = vmin.xlane.f32.xlu0 %v911
        %v913 = vpop.xlane.xlu0 %912
        %v914 = vmin.f32 %v839, %v840
        %915 = vmin.xlane.f32.xlu0 %v914
        %v916 = vpop.xlane.xlu0 %915
        %v917 = vmin.f32 %v841, %v842
        %918 = vmin.xlane.f32.xlu0 %v917
        %v919 = vpop.xlane.xlu0 %918
        %v920 = vmin.f32 %v843, %v844
        %921 = vmin.xlane.f32.xlu0 %v920
        %v922 = vpop.xlane.xlu0 %921
        %v923 = vmin.f32 %v845, %v846
        %924 = vmin.xlane.f32.xlu0 %v923
        %v925 = vpop.xlane.xlu0 %924
        %v926 = vmin.f32 %v847, %v848
        %927 = vmin.xlane.f32.xlu0 %v926
        %v928 = vpop.xlane.xlu0 %927
        %v929 = vmin.f32 %v849, %v850
        %930 = vmin.xlane.f32.xlu0 %v929
        %v931 = vpop.xlane.xlu0 %930
        %v932 = vmin.f32 %v851, %v852
        %933 = vmin.xlane.f32.xlu0 %v932
        %v934 = vpop.xlane.xlu0 %933
        %v935 = vmin.f32 %v853, %v854
        %936 = vmin.xlane.f32.xlu0 %v935
        %v937 = vpop.xlane.xlu0 %936
        %v938 = vmin.f32 %v855, %v856
        %939 = vmin.xlane.f32.xlu0 %v938
        %v940 = vpop.xlane.xlu0 %939
        %v941 = vmin.f32 %v857, %v858
        %942 = vmin.xlane.f32.xlu0 %v941
        %v943 = vpop.xlane.xlu0 %942
        %v944 = vmin.f32 %v859, %v860
        %945 = vmin.xlane.f32.xlu0 %v944
        %v946 = vpop.xlane.xlu0 %945
        %v947 = vmin.f32 %v861, %v862
        %948 = vmin.xlane.f32.xlu0 %v947
        %v949 = vpop.xlane.xlu0 %948
        %v950 = vmin.f32 %v863, %v864
        %951 = vmin.xlane.f32.xlu0 %v950
        %v952 = vpop.xlane.xlu0 %951
        %v953 = vmin.f32 %v865, %v866
        %954 = vmin.xlane.f32.xlu0 %v953
        %v955 = vpop.xlane.xlu0 %954
        %v956 = vmin.f32 %v867, %v868
        %957 = vmin.xlane.f32.xlu0 %v956
        %v958 = vpop.xlane.xlu0 %957
        %v959 = vmin.f32 %v869, %v870
        %960 = vmin.xlane.f32.xlu0 %v959
        %v961 = vpop.xlane.xlu0 %960
        %v962 = vmin.f32 %v871, %v872
        %963 = vmin.xlane.f32.xlu0 %v962
        %v964 = vpop.xlane.xlu0 %963
        %v965 = vmin.f32 %v873, %v874
        %966 = vmin.xlane.f32.xlu0 %v965
        %v967 = vpop.xlane.xlu0 %966
        %v968 = vmin.f32 %v875, %v876
        %969 = vmin.xlane.f32.xlu0 %v968
        %v970 = vpop.xlane.xlu0 %969
        %v971 = vmin.f32 %v877, %v878
        %972 = vmin.xlane.f32.xlu0 %v971
        %v973 = vpop.xlane.xlu0 %972
        %v974 = vmin.f32 %v879, %v880
        %975 = vmin.xlane.f32.xlu0 %v974
        %v976 = vpop.xlane.xlu0 %975
        %v977 = vmin.f32 %v881, %v882
        %978 = vmin.xlane.f32.xlu0 %v977
        %v979 = vpop.xlane.xlu0 %978
        %v980 = vmin.f32 %v883, %v884
        %981 = vmin.xlane.f32.xlu0 %v980
        %v982 = vpop.xlane.xlu0 %981
        %v983 = vmin.f32 %v885, %v886
        %984 = vmin.xlane.f32.xlu0 %v983
        %v985 = vpop.xlane.xlu0 %984
        %vm986 = vcmp.eq.f32.partialorder %v823, %v892
        %vm987 = vcmp.eq.f32.partialorder %v824, %v892
        %vm988 = vcmp.eq.f32.partialorder %v825, %v895
        %vm989 = vcmp.eq.f32.partialorder %v826, %v895
        %vm990 = vcmp.eq.f32.partialorder %v827, %v898
        %vm991 = vcmp.eq.f32.partialorder %v828, %v898
        %vm992 = vcmp.eq.f32.partialorder %v829, %v901
        %vm993 = vcmp.eq.f32.partialorder %v830, %v901
        %vm994 = vcmp.eq.f32.partialorder %v831, %v904
        %vm995 = vcmp.eq.f32.partialorder %v832, %v904
        %vm996 = vcmp.eq.f32.partialorder %v833, %v907
        %vm997 = vcmp.eq.f32.partialorder %v834, %v907
        %vm998 = vcmp.eq.f32.partialorder %v835, %v910
        %vm999 = vcmp.eq.f32.partialorder %v836, %v910
        %vm1000 = vcmp.eq.f32.partialorder %v837, %v913
        %vm1001 = vcmp.eq.f32.partialorder %v838, %v913
        %vm1002 = vcmp.eq.f32.partialorder %v839, %v916
        %vm1003 = vcmp.eq.f32.partialorder %v840, %v916
        %vm1004 = vcmp.eq.f32.partialorder %v841, %v919
        %vm1005 = vcmp.eq.f32.partialorder %v842, %v919
        %vm1006 = vcmp.eq.f32.partialorder %v843, %v922
        %vm1007 = vcmp.eq.f32.partialorder %v844, %v922
        %vm1008 = vcmp.eq.f32.partialorder %v845, %v925
        %vm1009 = vcmp.eq.f32.partialorder %v846, %v925
        %vm1010 = vcmp.eq.f32.partialorder %v847, %v928
        %vm1011 = vcmp.eq.f32.partialorder %v848, %v928
        %vm1012 = vcmp.eq.f32.partialorder %v849, %v931
        %vm1013 = vcmp.eq.f32.partialorder %v850, %v931
        %vm1014 = vcmp.eq.f32.partialorder %v851, %v934
        %vm1015 = vcmp.eq.f32.partialorder %v852, %v934
        %vm1016 = vcmp.eq.f32.partialorder %v853, %v937
        %vm1017 = vcmp.eq.f32.partialorder %v854, %v937
        %vm1018 = vcmp.eq.f32.partialorder %v855, %v940
        %vm1019 = vcmp.eq.f32.partialorder %v856, %v940
        %vm1020 = vcmp.eq.f32.partialorder %v857, %v943
        %vm1021 = vcmp.eq.f32.partialorder %v858, %v943
        %vm1022 = vcmp.eq.f32.partialorder %v859, %v946
        %vm1023 = vcmp.eq.f32.partialorder %v860, %v946
        %vm1024 = vcmp.eq.f32.partialorder %v861, %v949
        %vm1025 = vcmp.eq.f32.partialorder %v862, %v949
        %vm1026 = vcmp.eq.f32.partialorder %v863, %v952
        %vm1027 = vcmp.eq.f32.partialorder %v864, %v952
        %vm1028 = vcmp.eq.f32.partialorder %v865, %v955
        %vm1029 = vcmp.eq.f32.partialorder %v866, %v955
        %vm1030 = vcmp.eq.f32.partialorder %v867, %v958
        %vm1031 = vcmp.eq.f32.partialorder %v868, %v958
        %vm1032 = vcmp.eq.f32.partialorder %v869, %v961
        %vm1033 = vcmp.eq.f32.partialorder %v870, %v961
        %vm1034 = vcmp.eq.f32.partialorder %v871, %v964
        %vm1035 = vcmp.eq.f32.partialorder %v872, %v964
        %vm1036 = vcmp.eq.f32.partialorder %v873, %v967
        %vm1037 = vcmp.eq.f32.partialorder %v874, %v967
        %vm1038 = vcmp.eq.f32.partialorder %v875, %v970
        %vm1039 = vcmp.eq.f32.partialorder %v876, %v970
        %vm1040 = vcmp.eq.f32.partialorder %v877, %v973
        %vm1041 = vcmp.eq.f32.partialorder %v878, %v973
        %vm1042 = vcmp.eq.f32.partialorder %v879, %v976
        %vm1043 = vcmp.eq.f32.partialorder %v880, %v976
        %vm1044 = vcmp.eq.f32.partialorder %v881, %v979
        %vm1045 = vcmp.eq.f32.partialorder %v882, %v979
        %vm1046 = vcmp.eq.f32.partialorder %v883, %v982
        %vm1047 = vcmp.eq.f32.partialorder %v884, %v982
        %vm1048 = vcmp.eq.f32.partialorder %v885, %v985
        %vm1049 = vcmp.eq.f32.partialorder %v886, %v985
        %v1050 = vsel %vm986, %v888, 256
        %v1051 = vsel %vm987, %v889, 256
        %v1052 = vsel %vm988, %v888, 256
        %v1053 = vsel %vm989, %v889, 256
        %v1054 = vsel %vm990, %v888, 256
        %v1055 = vsel %vm991, %v889, 256
        %v1056 = vsel %vm992, %v888, 256
        %v1057 = vsel %vm993, %v889, 256
        %v1058 = vsel %vm994, %v888, 256
        %v1059 = vsel %vm995, %v889, 256
        %v1060 = vsel %vm996, %v888, 256
        %v1061 = vsel %vm997, %v889, 256
        %v1062 = vsel %vm998, %v888, 256
        %v1063 = vsel %vm999, %v889, 256
        %v1064 = vsel %vm1000, %v888, 256
        %v1065 = vsel %vm1001, %v889, 256
        %v1066 = vsel %vm1002, %v888, 256
        %v1067 = vsel %vm1003, %v889, 256
        %v1068 = vsel %vm1004, %v888, 256
        %v1069 = vsel %vm1005, %v889, 256
        %v1070 = vsel %vm1006, %v888, 256
        %v1071 = vsel %vm1007, %v889, 256
        %v1072 = vsel %vm1008, %v888, 256
        %v1073 = vsel %vm1009, %v889, 256
        %v1074 = vsel %vm1010, %v888, 256
        %v1075 = vsel %vm1011, %v889, 256
        %v1076 = vsel %vm1012, %v888, 256
        %v1077 = vsel %vm1013, %v889, 256
        %v1078 = vsel %vm1014, %v888, 256
        %v1079 = vsel %vm1015, %v889, 256
        %v1080 = vsel %vm1016, %v888, 256
        %v1081 = vsel %vm1017, %v889, 256
        %v1082 = vsel %vm1018, %v888, 256
        %v1083 = vsel %vm1019, %v889, 256
        %v1084 = vsel %vm1020, %v888, 256
        %v1085 = vsel %vm1021, %v889, 256
        %v1086 = vsel %vm1022, %v888, 256
        %v1087 = vsel %vm1023, %v889, 256
        %v1088 = vsel %vm1024, %v888, 256
        %v1089 = vsel %vm1025, %v889, 256
        %v1090 = vsel %vm1026, %v888, 256
        %v1091 = vsel %vm1027, %v889, 256
        %v1092 = vsel %vm1028, %v888, 256
        %v1093 = vsel %vm1029, %v889, 256
        %v1094 = vsel %vm1030, %v888, 256
        %v1095 = vsel %vm1031, %v889, 256
        %v1096 = vsel %vm1032, %v888, 256
        %v1097 = vsel %vm1033, %v889, 256
        %v1098 = vsel %vm1034, %v888, 256
        %v1099 = vsel %vm1035, %v889, 256
        %v1100 = vsel %vm1036, %v888, 256
        %v1101 = vsel %vm1037, %v889, 256
        %v1102 = vsel %vm1038, %v888, 256
        %v1103 = vsel %vm1039, %v889, 256
        %v1104 = vsel %vm1040, %v888, 256
        %v1105 = vsel %vm1041, %v889, 256
        %v1106 = vsel %vm1042, %v888, 256
        %v1107 = vsel %vm1043, %v889, 256
        %v1108 = vsel %vm1044, %v888, 256
        %v1109 = vsel %vm1045, %v889, 256
        %v1110 = vsel %vm1046, %v888, 256
        %v1111 = vsel %vm1047, %v889, 256
        %v1112 = vsel %vm1048, %v888, 256
        %v1113 = vsel %vm1049, %v889, 256
        %vm1114 = vcmp.lt.s32.totalorder %v1050, %v1051
        %v1115 = vsel %vm1114, %v1050, %v1051
        %v1116 = vand.u32 %v1115, 65535
        %v1117 = vshra.s32 %v1115, 16
        %v1118 = vcvt.s32.f32 %v1116
        %v1119 = vcvt.s32.f32 %v1117
        %1120 = vmin.xlane.f32.xlu0 %v1119
        %v1121 = vpop.xlane.xlu0 %1120
        %vm1122 = vcmp.eq.f32.partialorder %v1119, %v1121
        %v1123 = vsel %vm1122, %v1118, inf
        %1124 = vmin.xlane.f32.xlu0 %v1123
        %v1125 = vpop.xlane.xlu0 %1124
        %v1126 = vcvt.f32.s32 %v1125
        %v1127 = vcvt.f32.s32 %v1121
        %v1128 = vshll.u32 %v1127, 16
        %v1129 = vadd.s32 %v1128, %v1126
        %vm1130 = vcmp.lt.s32.totalorder %v1052, %v1053
        %v1131 = vsel %vm1130, %v1052, %v1053
        %v1132 = vand.u32 %v1131, 65535
        %v1133 = vshra.s32 %v1131, 16
        %v1134 = vcvt.s32.f32 %v1132
        %v1135 = vcvt.s32.f32 %v1133
        %1136 = vmin.xlane.f32.xlu0 %v1135
        %v1137 = vpop.xlane.xlu0 %1136
        %vm1138 = vcmp.eq.f32.partialorder %v1135, %v1137
        %v1139 = vsel %vm1138, %v1134, inf
        %1140 = vmin.xlane.f32.xlu0 %v1139
        %v1141 = vpop.xlane.xlu0 %1140
        %v1142 = vcvt.f32.s32 %v1141
        %v1143 = vcvt.f32.s32 %v1137
        %v1144 = vshll.u32 %v1143, 16
        %v1145 = vadd.s32 %v1144, %v1142
        %vm1146 = vcmp.lt.s32.totalorder %v1054, %v1055
        %v1147 = vsel %vm1146, %v1054, %v1055
        %v1148 = vand.u32 %v1147, 65535
        %v1149 = vshra.s32 %v1147, 16
        %v1150 = vcvt.s32.f32 %v1148
        %v1151 = vcvt.s32.f32 %v1149
        %1152 = vmin.xlane.f32.xlu0 %v1151
        %v1153 = vpop.xlane.xlu0 %1152
        %vm1154 = vcmp.eq.f32.partialorder %v1151, %v1153
        %v1155 = vsel %vm1154, %v1150, inf
        %1156 = vmin.xlane.f32.xlu0 %v1155
        %v1157 = vpop.xlane.xlu0 %1156
        %v1158 = vcvt.f32.s32 %v1157
        %v1159 = vcvt.f32.s32 %v1153
        %v1160 = vshll.u32 %v1159, 16
        %v1161 = vadd.s32 %v1160, %v1158
        %vm1162 = vcmp.lt.s32.totalorder %v1056, %v1057
        %v1163 = vsel %vm1162, %v1056, %v1057
        %v1164 = vand.u32 %v1163, 65535
        %v1165 = vshra.s32 %v1163, 16
        %v1166 = vcvt.s32.f32 %v1164
        %v1167 = vcvt.s32.f32 %v1165
        %1168 = vmin.xlane.f32.xlu0 %v1167
        %v1169 = vpop.xlane.xlu0 %1168
        %vm1170 = vcmp.eq.f32.partialorder %v1167, %v1169
        %v1171 = vsel %vm1170, %v1166, inf
        %1172 = vmin.xlane.f32.xlu0 %v1171
        %v1173 = vpop.xlane.xlu0 %1172
        %v1174 = vcvt.f32.s32 %v1173
        %v1175 = vcvt.f32.s32 %v1169
        %v1176 = vshll.u32 %v1175, 16
        %v1177 = vadd.s32 %v1176, %v1174
        %vm1178 = vcmp.lt.s32.totalorder %v1058, %v1059
        %v1179 = vsel %vm1178, %v1058, %v1059
        %v1180 = vand.u32 %v1179, 65535
        %v1181 = vshra.s32 %v1179, 16
        %v1182 = vcvt.s32.f32 %v1180
        %v1183 = vcvt.s32.f32 %v1181
        %1184 = vmin.xlane.f32.xlu0 %v1183
        %v1185 = vpop.xlane.xlu0 %1184
        %vm1186 = vcmp.eq.f32.partialorder %v1183, %v1185
        %v1187 = vsel %vm1186, %v1182, inf
        %1188 = vmin.xlane.f32.xlu0 %v1187
        %v1189 = vpop.xlane.xlu0 %1188
        %v1190 = vcvt.f32.s32 %v1189
        %v1191 = vcvt.f32.s32 %v1185
        %v1192 = vshll.u32 %v1191, 16
        %v1193 = vadd.s32 %v1192, %v1190
        %vm1194 = vcmp.lt.s32.totalorder %v1060, %v1061
        %v1195 = vsel %vm1194, %v1060, %v1061
        %v1196 = vand.u32 %v1195, 65535
        %v1197 = vshra.s32 %v1195, 16
        %v1198 = vcvt.s32.f32 %v1196
        %v1199 = vcvt.s32.f32 %v1197
        %1200 = vmin.xlane.f32.xlu0 %v1199
        %v1201 = vpop.xlane.xlu0 %1200
        %vm1202 = vcmp.eq.f32.partialorder %v1199, %v1201
        %v1203 = vsel %vm1202, %v1198, inf
        %1204 = vmin.xlane.f32.xlu0 %v1203
        %v1205 = vpop.xlane.xlu0 %1204
        %v1206 = vcvt.f32.s32 %v1205
        %v1207 = vcvt.f32.s32 %v1201
        %v1208 = vshll.u32 %v1207, 16
        %v1209 = vadd.s32 %v1208, %v1206
        %vm1210 = vcmp.lt.s32.totalorder %v1062, %v1063
        %v1211 = vsel %vm1210, %v1062, %v1063
        %v1212 = vand.u32 %v1211, 65535
        %v1213 = vshra.s32 %v1211, 16
        %v1214 = vcvt.s32.f32 %v1212
        %v1215 = vcvt.s32.f32 %v1213
        %1216 = vmin.xlane.f32.xlu0 %v1215
        %v1217 = vpop.xlane.xlu0 %1216
        %vm1218 = vcmp.eq.f32.partialorder %v1215, %v1217
        %v1219 = vsel %vm1218, %v1214, inf
        %1220 = vmin.xlane.f32.xlu0 %v1219
        %v1221 = vpop.xlane.xlu0 %1220
        %v1222 = vcvt.f32.s32 %v1221
        %v1223 = vcvt.f32.s32 %v1217
        %v1224 = vshll.u32 %v1223, 16
        %v1225 = vadd.s32 %v1224, %v1222
        %vm1226 = vcmp.lt.s32.totalorder %v1064, %v1065
        %v1227 = vsel %vm1226, %v1064, %v1065
        %v1228 = vand.u32 %v1227, 65535
        %v1229 = vshra.s32 %v1227, 16
        %v1230 = vcvt.s32.f32 %v1228
        %v1231 = vcvt.s32.f32 %v1229
        %1232 = vmin.xlane.f32.xlu0 %v1231
        %v1233 = vpop.xlane.xlu0 %1232
        %vm1234 = vcmp.eq.f32.partialorder %v1231, %v1233
        %v1235 = vsel %vm1234, %v1230, inf
        %1236 = vmin.xlane.f32.xlu0 %v1235
        %v1237 = vpop.xlane.xlu0 %1236
        %v1238 = vcvt.f32.s32 %v1237
        %v1239 = vcvt.f32.s32 %v1233
        %v1240 = vshll.u32 %v1239, 16
        %v1241 = vadd.s32 %v1240, %v1238
        %vm1242 = vcmp.lt.s32.totalorder %v1066, %v1067
        %v1243 = vsel %vm1242, %v1066, %v1067
        %v1244 = vand.u32 %v1243, 65535
        %v1245 = vshra.s32 %v1243, 16
        %v1246 = vcvt.s32.f32 %v1244
        %v1247 = vcvt.s32.f32 %v1245
        %1248 = vmin.xlane.f32.xlu0 %v1247
        %v1249 = vpop.xlane.xlu0 %1248
        %vm1250 = vcmp.eq.f32.partialorder %v1247, %v1249
        %v1251 = vsel %vm1250, %v1246, inf
        %1252 = vmin.xlane.f32.xlu0 %v1251
        %v1253 = vpop.xlane.xlu0 %1252
        %v1254 = vcvt.f32.s32 %v1253
        %v1255 = vcvt.f32.s32 %v1249
        %v1256 = vshll.u32 %v1255, 16
        %v1257 = vadd.s32 %v1256, %v1254
        %vm1258 = vcmp.lt.s32.totalorder %v1068, %v1069
        %v1259 = vsel %vm1258, %v1068, %v1069
        %v1260 = vand.u32 %v1259, 65535
        %v1261 = vshra.s32 %v1259, 16
        %v1262 = vcvt.s32.f32 %v1260
        %v1263 = vcvt.s32.f32 %v1261
        %1264 = vmin.xlane.f32.xlu0 %v1263
        %v1265 = vpop.xlane.xlu0 %1264
        %vm1266 = vcmp.eq.f32.partialorder %v1263, %v1265
        %v1267 = vsel %vm1266, %v1262, inf
        %1268 = vmin.xlane.f32.xlu0 %v1267
        %v1269 = vpop.xlane.xlu0 %1268
        %v1270 = vcvt.f32.s32 %v1269
        %v1271 = vcvt.f32.s32 %v1265
        %v1272 = vshll.u32 %v1271, 16
        %v1273 = vadd.s32 %v1272, %v1270
        %vm1274 = vcmp.lt.s32.totalorder %v1070, %v1071
        %v1275 = vsel %vm1274, %v1070, %v1071
        %v1276 = vand.u32 %v1275, 65535
        %v1277 = vshra.s32 %v1275, 16
        %v1278 = vcvt.s32.f32 %v1276
        %v1279 = vcvt.s32.f32 %v1277
        %1280 = vmin.xlane.f32.xlu0 %v1279
        %v1281 = vpop.xlane.xlu0 %1280
        %vm1282 = vcmp.eq.f32.partialorder %v1279, %v1281
        %v1283 = vsel %vm1282, %v1278, inf
        %1284 = vmin.xlane.f32.xlu0 %v1283
        %v1285 = vpop.xlane.xlu0 %1284
        %v1286 = vcvt.f32.s32 %v1285
        %v1287 = vcvt.f32.s32 %v1281
        %v1288 = vshll.u32 %v1287, 16
        %v1289 = vadd.s32 %v1288, %v1286
        %vm1290 = vcmp.lt.s32.totalorder %v1072, %v1073
        %v1291 = vsel %vm1290, %v1072, %v1073
        %v1292 = vand.u32 %v1291, 65535
        %v1293 = vshra.s32 %v1291, 16
        %v1294 = vcvt.s32.f32 %v1292
        %v1295 = vcvt.s32.f32 %v1293
        %1296 = vmin.xlane.f32.xlu0 %v1295
        %v1297 = vpop.xlane.xlu0 %1296
        %vm1298 = vcmp.eq.f32.partialorder %v1295, %v1297
        %v1299 = vsel %vm1298, %v1294, inf
        %1300 = vmin.xlane.f32.xlu0 %v1299
        %v1301 = vpop.xlane.xlu0 %1300
        %v1302 = vcvt.f32.s32 %v1301
        %v1303 = vcvt.f32.s32 %v1297
        %v1304 = vshll.u32 %v1303, 16
        %v1305 = vadd.s32 %v1304, %v1302
        %vm1306 = vcmp.lt.s32.totalorder %v1074, %v1075
        %v1307 = vsel %vm1306, %v1074, %v1075
        %v1308 = vand.u32 %v1307, 65535
        %v1309 = vshra.s32 %v1307, 16
        %v1310 = vcvt.s32.f32 %v1308
        %v1311 = vcvt.s32.f32 %v1309
        %1312 = vmin.xlane.f32.xlu0 %v1311
        %v1313 = vpop.xlane.xlu0 %1312
        %vm1314 = vcmp.eq.f32.partialorder %v1311, %v1313
        %v1315 = vsel %vm1314, %v1310, inf
        %1316 = vmin.xlane.f32.xlu0 %v1315
        %v1317 = vpop.xlane.xlu0 %1316
        %v1318 = vcvt.f32.s32 %v1317
        %v1319 = vcvt.f32.s32 %v1313
        %v1320 = vshll.u32 %v1319, 16
        %v1321 = vadd.s32 %v1320, %v1318
        %vm1322 = vcmp.lt.s32.totalorder %v1076, %v1077
        %v1323 = vsel %vm1322, %v1076, %v1077
        %v1324 = vand.u32 %v1323, 65535
        %v1325 = vshra.s32 %v1323, 16
        %v1326 = vcvt.s32.f32 %v1324
        %v1327 = vcvt.s32.f32 %v1325
        %1328 = vmin.xlane.f32.xlu0 %v1327
        %v1329 = vpop.xlane.xlu0 %1328
        %vm1330 = vcmp.eq.f32.partialorder %v1327, %v1329
        %v1331 = vsel %vm1330, %v1326, inf
        %1332 = vmin.xlane.f32.xlu0 %v1331
        %v1333 = vpop.xlane.xlu0 %1332
        %v1334 = vcvt.f32.s32 %v1333
        %v1335 = vcvt.f32.s32 %v1329
        %v1336 = vshll.u32 %v1335, 16
        %v1337 = vadd.s32 %v1336, %v1334
        %vm1338 = vcmp.lt.s32.totalorder %v1078, %v1079
        %v1339 = vsel %vm1338, %v1078, %v1079
        %v1340 = vand.u32 %v1339, 65535
        %v1341 = vshra.s32 %v1339, 16
        %v1342 = vcvt.s32.f32 %v1340
        %v1343 = vcvt.s32.f32 %v1341
        %1344 = vmin.xlane.f32.xlu0 %v1343
        %v1345 = vpop.xlane.xlu0 %1344
        %vm1346 = vcmp.eq.f32.partialorder %v1343, %v1345
        %v1347 = vsel %vm1346, %v1342, inf
        %1348 = vmin.xlane.f32.xlu0 %v1347
        %v1349 = vpop.xlane.xlu0 %1348
        %v1350 = vcvt.f32.s32 %v1349
        %v1351 = vcvt.f32.s32 %v1345
        %v1352 = vshll.u32 %v1351, 16
        %v1353 = vadd.s32 %v1352, %v1350
        %vm1354 = vcmp.lt.s32.totalorder %v1080, %v1081
        %v1355 = vsel %vm1354, %v1080, %v1081
        %v1356 = vand.u32 %v1355, 65535
        %v1357 = vshra.s32 %v1355, 16
        %v1358 = vcvt.s32.f32 %v1356
        %v1359 = vcvt.s32.f32 %v1357
        %1360 = vmin.xlane.f32.xlu0 %v1359
        %v1361 = vpop.xlane.xlu0 %1360
        %vm1362 = vcmp.eq.f32.partialorder %v1359, %v1361
        %v1363 = vsel %vm1362, %v1358, inf
        %1364 = vmin.xlane.f32.xlu0 %v1363
        %v1365 = vpop.xlane.xlu0 %1364
        %v1366 = vcvt.f32.s32 %v1365
        %v1367 = vcvt.f32.s32 %v1361
        %v1368 = vshll.u32 %v1367, 16
        %v1369 = vadd.s32 %v1368, %v1366
        %vm1370 = vcmp.lt.s32.totalorder %v1082, %v1083
        %v1371 = vsel %vm1370, %v1082, %v1083
        %v1372 = vand.u32 %v1371, 65535
        %v1373 = vshra.s32 %v1371, 16
        %v1374 = vcvt.s32.f32 %v1372
        %v1375 = vcvt.s32.f32 %v1373
        %1376 = vmin.xlane.f32.xlu0 %v1375
        %v1377 = vpop.xlane.xlu0 %1376
        %vm1378 = vcmp.eq.f32.partialorder %v1375, %v1377
        %v1379 = vsel %vm1378, %v1374, inf
        %1380 = vmin.xlane.f32.xlu0 %v1379
        %v1381 = vpop.xlane.xlu0 %1380
        %v1382 = vcvt.f32.s32 %v1381
        %v1383 = vcvt.f32.s32 %v1377
        %v1384 = vshll.u32 %v1383, 16
        %v1385 = vadd.s32 %v1384, %v1382
        %vm1386 = vcmp.lt.s32.totalorder %v1084, %v1085
        %v1387 = vsel %vm1386, %v1084, %v1085
        %v1388 = vand.u32 %v1387, 65535
        %v1389 = vshra.s32 %v1387, 16
        %v1390 = vcvt.s32.f32 %v1388
        %v1391 = vcvt.s32.f32 %v1389
        %1392 = vmin.xlane.f32.xlu0 %v1391
        %v1393 = vpop.xlane.xlu0 %1392
        %vm1394 = vcmp.eq.f32.partialorder %v1391, %v1393
        %v1395 = vsel %vm1394, %v1390, inf
        %1396 = vmin.xlane.f32.xlu0 %v1395
        %v1397 = vpop.xlane.xlu0 %1396
        %v1398 = vcvt.f32.s32 %v1397
        %v1399 = vcvt.f32.s32 %v1393
        %v1400 = vshll.u32 %v1399, 16
        %v1401 = vadd.s32 %v1400, %v1398
        %vm1402 = vcmp.lt.s32.totalorder %v1086, %v1087
        %v1403 = vsel %vm1402, %v1086, %v1087
        %v1404 = vand.u32 %v1403, 65535
        %v1405 = vshra.s32 %v1403, 16
        %v1406 = vcvt.s32.f32 %v1404
        %v1407 = vcvt.s32.f32 %v1405
        %1408 = vmin.xlane.f32.xlu0 %v1407
        %v1409 = vpop.xlane.xlu0 %1408
        %vm1410 = vcmp.eq.f32.partialorder %v1407, %v1409
        %v1411 = vsel %vm1410, %v1406, inf
        %1412 = vmin.xlane.f32.xlu0 %v1411
        %v1413 = vpop.xlane.xlu0 %1412
        %v1414 = vcvt.f32.s32 %v1413
        %v1415 = vcvt.f32.s32 %v1409
        %v1416 = vshll.u32 %v1415, 16
        %v1417 = vadd.s32 %v1416, %v1414
        %vm1418 = vcmp.lt.s32.totalorder %v1088, %v1089
        %v1419 = vsel %vm1418, %v1088, %v1089
        %v1420 = vand.u32 %v1419, 65535
        %v1421 = vshra.s32 %v1419, 16
        %v1422 = vcvt.s32.f32 %v1420
        %v1423 = vcvt.s32.f32 %v1421
        %1424 = vmin.xlane.f32.xlu0 %v1423
        %v1425 = vpop.xlane.xlu0 %1424
        %vm1426 = vcmp.eq.f32.partialorder %v1423, %v1425
        %v1427 = vsel %vm1426, %v1422, inf
        %1428 = vmin.xlane.f32.xlu0 %v1427
        %v1429 = vpop.xlane.xlu0 %1428
        %v1430 = vcvt.f32.s32 %v1429
        %v1431 = vcvt.f32.s32 %v1425
        %v1432 = vshll.u32 %v1431, 16
        %v1433 = vadd.s32 %v1432, %v1430
        %vm1434 = vcmp.lt.s32.totalorder %v1090, %v1091
        %v1435 = vsel %vm1434, %v1090, %v1091
        %v1436 = vand.u32 %v1435, 65535
        %v1437 = vshra.s32 %v1435, 16
        %v1438 = vcvt.s32.f32 %v1436
        %v1439 = vcvt.s32.f32 %v1437
        %1440 = vmin.xlane.f32.xlu0 %v1439
        %v1441 = vpop.xlane.xlu0 %1440
        %vm1442 = vcmp.eq.f32.partialorder %v1439, %v1441
        %v1443 = vsel %vm1442, %v1438, inf
        %1444 = vmin.xlane.f32.xlu0 %v1443
        %v1445 = vpop.xlane.xlu0 %1444
        %v1446 = vcvt.f32.s32 %v1445
        %v1447 = vcvt.f32.s32 %v1441
        %v1448 = vshll.u32 %v1447, 16
        %v1449 = vadd.s32 %v1448, %v1446
        %vm1450 = vcmp.lt.s32.totalorder %v1092, %v1093
        %v1451 = vsel %vm1450, %v1092, %v1093
        %v1452 = vand.u32 %v1451, 65535
        %v1453 = vshra.s32 %v1451, 16
        %v1454 = vcvt.s32.f32 %v1452
        %v1455 = vcvt.s32.f32 %v1453
        %1456 = vmin.xlane.f32.xlu0 %v1455
        %v1457 = vpop.xlane.xlu0 %1456
        %vm1458 = vcmp.eq.f32.partialorder %v1455, %v1457
        %v1459 = vsel %vm1458, %v1454, inf
        %1460 = vmin.xlane.f32.xlu0 %v1459
        %v1461 = vpop.xlane.xlu0 %1460
        %v1462 = vcvt.f32.s32 %v1461
        %v1463 = vcvt.f32.s32 %v1457
        %v1464 = vshll.u32 %v1463, 16
        %v1465 = vadd.s32 %v1464, %v1462
        %vm1466 = vcmp.lt.s32.totalorder %v1094, %v1095
        %v1467 = vsel %vm1466, %v1094, %v1095
        %v1468 = vand.u32 %v1467, 65535
        %v1469 = vshra.s32 %v1467, 16
        %v1470 = vcvt.s32.f32 %v1468
        %v1471 = vcvt.s32.f32 %v1469
        %1472 = vmin.xlane.f32.xlu0 %v1471
        %v1473 = vpop.xlane.xlu0 %1472
        %vm1474 = vcmp.eq.f32.partialorder %v1471, %v1473
        %v1475 = vsel %vm1474, %v1470, inf
        %1476 = vmin.xlane.f32.xlu0 %v1475
        %v1477 = vpop.xlane.xlu0 %1476
        %v1478 = vcvt.f32.s32 %v1477
        %v1479 = vcvt.f32.s32 %v1473
        %v1480 = vshll.u32 %v1479, 16
        %v1481 = vadd.s32 %v1480, %v1478
        %vm1482 = vcmp.lt.s32.totalorder %v1096, %v1097
        %v1483 = vsel %vm1482, %v1096, %v1097
        %v1484 = vand.u32 %v1483, 65535
        %v1485 = vshra.s32 %v1483, 16
        %v1486 = vcvt.s32.f32 %v1484
        %v1487 = vcvt.s32.f32 %v1485
        %1488 = vmin.xlane.f32.xlu0 %v1487
        %v1489 = vpop.xlane.xlu0 %1488
        %vm1490 = vcmp.eq.f32.partialorder %v1487, %v1489
        %v1491 = vsel %vm1490, %v1486, inf
        %1492 = vmin.xlane.f32.xlu0 %v1491
        %v1493 = vpop.xlane.xlu0 %1492
        %v1494 = vcvt.f32.s32 %v1493
        %v1495 = vcvt.f32.s32 %v1489
        %v1496 = vshll.u32 %v1495, 16
        %v1497 = vadd.s32 %v1496, %v1494
        %vm1498 = vcmp.lt.s32.totalorder %v1098, %v1099
        %v1499 = vsel %vm1498, %v1098, %v1099
        %v1500 = vand.u32 %v1499, 65535
        %v1501 = vshra.s32 %v1499, 16
        %v1502 = vcvt.s32.f32 %v1500
        %v1503 = vcvt.s32.f32 %v1501
        %1504 = vmin.xlane.f32.xlu0 %v1503
        %v1505 = vpop.xlane.xlu0 %1504
        %vm1506 = vcmp.eq.f32.partialorder %v1503, %v1505
        %v1507 = vsel %vm1506, %v1502, inf
        %1508 = vmin.xlane.f32.xlu0 %v1507
        %v1509 = vpop.xlane.xlu0 %1508
        %v1510 = vcvt.f32.s32 %v1509
        %v1511 = vcvt.f32.s32 %v1505
        %v1512 = vshll.u32 %v1511, 16
        %v1513 = vadd.s32 %v1512, %v1510
        %vm1514 = vcmp.lt.s32.totalorder %v1100, %v1101
        %v1515 = vsel %vm1514, %v1100, %v1101
        %v1516 = vand.u32 %v1515, 65535
        %v1517 = vshra.s32 %v1515, 16
        %v1518 = vcvt.s32.f32 %v1516
        %v1519 = vcvt.s32.f32 %v1517
        %1520 = vmin.xlane.f32.xlu0 %v1519
        %v1521 = vpop.xlane.xlu0 %1520
        %vm1522 = vcmp.eq.f32.partialorder %v1519, %v1521
        %v1523 = vsel %vm1522, %v1518, inf
        %1524 = vmin.xlane.f32.xlu0 %v1523
        %v1525 = vpop.xlane.xlu0 %1524
        %v1526 = vcvt.f32.s32 %v1525
        %v1527 = vcvt.f32.s32 %v1521
        %v1528 = vshll.u32 %v1527, 16
        %v1529 = vadd.s32 %v1528, %v1526
        %vm1530 = vcmp.lt.s32.totalorder %v1102, %v1103
        %v1531 = vsel %vm1530, %v1102, %v1103
        %v1532 = vand.u32 %v1531, 65535
        %v1533 = vshra.s32 %v1531, 16
        %v1534 = vcvt.s32.f32 %v1532
        %v1535 = vcvt.s32.f32 %v1533
        %1536 = vmin.xlane.f32.xlu0 %v1535
        %v1537 = vpop.xlane.xlu0 %1536
        %vm1538 = vcmp.eq.f32.partialorder %v1535, %v1537
        %v1539 = vsel %vm1538, %v1534, inf
        %1540 = vmin.xlane.f32.xlu0 %v1539
        %v1541 = vpop.xlane.xlu0 %1540
        %v1542 = vcvt.f32.s32 %v1541
        %v1543 = vcvt.f32.s32 %v1537
        %v1544 = vshll.u32 %v1543, 16
        %v1545 = vadd.s32 %v1544, %v1542
        %vm1546 = vcmp.lt.s32.totalorder %v1104, %v1105
        %v1547 = vsel %vm1546, %v1104, %v1105
        %v1548 = vand.u32 %v1547, 65535
        %v1549 = vshra.s32 %v1547, 16
        %v1550 = vcvt.s32.f32 %v1548
        %v1551 = vcvt.s32.f32 %v1549
        %1552 = vmin.xlane.f32.xlu0 %v1551
        %v1553 = vpop.xlane.xlu0 %1552
        %vm1554 = vcmp.eq.f32.partialorder %v1551, %v1553
        %v1555 = vsel %vm1554, %v1550, inf
        %1556 = vmin.xlane.f32.xlu0 %v1555
        %v1557 = vpop.xlane.xlu0 %1556
        %v1558 = vcvt.f32.s32 %v1557
        %v1559 = vcvt.f32.s32 %v1553
        %v1560 = vshll.u32 %v1559, 16
        %v1561 = vadd.s32 %v1560, %v1558
        %vm1562 = vcmp.lt.s32.totalorder %v1106, %v1107
        %v1563 = vsel %vm1562, %v1106, %v1107
        %v1564 = vand.u32 %v1563, 65535
        %v1565 = vshra.s32 %v1563, 16
        %v1566 = vcvt.s32.f32 %v1564
        %v1567 = vcvt.s32.f32 %v1565
        %1568 = vmin.xlane.f32.xlu0 %v1567
        %v1569 = vpop.xlane.xlu0 %1568
        %vm1570 = vcmp.eq.f32.partialorder %v1567, %v1569
        %v1571 = vsel %vm1570, %v1566, inf
        %1572 = vmin.xlane.f32.xlu0 %v1571
        %v1573 = vpop.xlane.xlu0 %1572
        %v1574 = vcvt.f32.s32 %v1573
        %v1575 = vcvt.f32.s32 %v1569
        %v1576 = vshll.u32 %v1575, 16
        %v1577 = vadd.s32 %v1576, %v1574
        %vm1578 = vcmp.lt.s32.totalorder %v1108, %v1109
        %v1579 = vsel %vm1578, %v1108, %v1109
        %v1580 = vand.u32 %v1579, 65535
        %v1581 = vshra.s32 %v1579, 16
        %v1582 = vcvt.s32.f32 %v1580
        %v1583 = vcvt.s32.f32 %v1581
        %1584 = vmin.xlane.f32.xlu0 %v1583
        %v1585 = vpop.xlane.xlu0 %1584
        %vm1586 = vcmp.eq.f32.partialorder %v1583, %v1585
        %v1587 = vsel %vm1586, %v1582, inf
        %1588 = vmin.xlane.f32.xlu0 %v1587
        %v1589 = vpop.xlane.xlu0 %1588
        %v1590 = vcvt.f32.s32 %v1589
        %v1591 = vcvt.f32.s32 %v1585
        %v1592 = vshll.u32 %v1591, 16
        %v1593 = vadd.s32 %v1592, %v1590
        %vm1594 = vcmp.lt.s32.totalorder %v1110, %v1111
        %v1595 = vsel %vm1594, %v1110, %v1111
        %v1596 = vand.u32 %v1595, 65535
        %v1597 = vshra.s32 %v1595, 16
        %v1598 = vcvt.s32.f32 %v1596
        %v1599 = vcvt.s32.f32 %v1597
        %1600 = vmin.xlane.f32.xlu0 %v1599
        %v1601 = vpop.xlane.xlu0 %1600
        %vm1602 = vcmp.eq.f32.partialorder %v1599, %v1601
        %v1603 = vsel %vm1602, %v1598, inf
        %1604 = vmin.xlane.f32.xlu0 %v1603
        %v1605 = vpop.xlane.xlu0 %1604
        %v1606 = vcvt.f32.s32 %v1605
        %v1607 = vcvt.f32.s32 %v1601
        %v1608 = vshll.u32 %v1607, 16
        %v1609 = vadd.s32 %v1608, %v1606
        %vm1610 = vcmp.lt.s32.totalorder %v1112, %v1113
        %v1611 = vsel %vm1610, %v1112, %v1113
        %v1612 = vand.u32 %v1611, 65535
        %v1613 = vshra.s32 %v1611, 16
        %v1614 = vcvt.s32.f32 %v1612
        %v1615 = vcvt.s32.f32 %v1613
        %1616 = vmin.xlane.f32.xlu0 %v1615
        %v1617 = vpop.xlane.xlu0 %1616
        %vm1618 = vcmp.eq.f32.partialorder %v1615, %v1617
        %v1619 = vsel %vm1618, %v1614, inf
        %1620 = vmin.xlane.f32.xlu0 %v1619
        %v1621 = vpop.xlane.xlu0 %1620
        %v1622 = vcvt.f32.s32 %v1621
        %v1623 = vcvt.f32.s32 %v1617
        %v1624 = vshll.u32 %v1623, 16
        %v1625 = vadd.s32 %v1624, %v1622
        %vm1626 = vcmp.eq.s32.totalorder %v888, %v1129
        %vm1627 = vcmp.eq.s32.totalorder %v889, %v1129
        %vm1628 = vcmp.eq.s32.totalorder %v888, %v1145
        %vm1629 = vcmp.eq.s32.totalorder %v889, %v1145
        %vm1630 = vcmp.eq.s32.totalorder %v888, %v1161
        %vm1631 = vcmp.eq.s32.totalorder %v889, %v1161
        %vm1632 = vcmp.eq.s32.totalorder %v888, %v1177
        %vm1633 = vcmp.eq.s32.totalorder %v889, %v1177
        %vm1634 = vcmp.eq.s32.totalorder %v888, %v1193
        %vm1635 = vcmp.eq.s32.totalorder %v889, %v1193
        %vm1636 = vcmp.eq.s32.totalorder %v888, %v1209
        %vm1637 = vcmp.eq.s32.totalorder %v889, %v1209
        %vm1638 = vcmp.eq.s32.totalorder %v888, %v1225
        %vm1639 = vcmp.eq.s32.totalorder %v889, %v1225
        %vm1640 = vcmp.eq.s32.totalorder %v888, %v1241
        %vm1641 = vcmp.eq.s32.totalorder %v889, %v1241
        %vm1642 = vcmp.eq.s32.totalorder %v888, %v1257
        %vm1643 = vcmp.eq.s32.totalorder %v889, %v1257
        %vm1644 = vcmp.eq.s32.totalorder %v888, %v1273
        %vm1645 = vcmp.eq.s32.totalorder %v889, %v1273
        %vm1646 = vcmp.eq.s32.totalorder %v888, %v1289
        %vm1647 = vcmp.eq.s32.totalorder %v889, %v1289
        %vm1648 = vcmp.eq.s32.totalorder %v888, %v1305
        %vm1649 = vcmp.eq.s32.totalorder %v889, %v1305
        %vm1650 = vcmp.eq.s32.totalorder %v888, %v1321
        %vm1651 = vcmp.eq.s32.totalorder %v889, %v1321
        %vm1652 = vcmp.eq.s32.totalorder %v888, %v1337
        %vm1653 = vcmp.eq.s32.totalorder %v889, %v1337
        %vm1654 = vcmp.eq.s32.totalorder %v888, %v1353
        %vm1655 = vcmp.eq.s32.totalorder %v889, %v1353
        %vm1656 = vcmp.eq.s32.totalorder %v888, %v1369
        %vm1657 = vcmp.eq.s32.totalorder %v889, %v1369
        %vm1658 = vcmp.eq.s32.totalorder %v888, %v1385
        %vm1659 = vcmp.eq.s32.totalorder %v889, %v1385
        %vm1660 = vcmp.eq.s32.totalorder %v888, %v1401
        %vm1661 = vcmp.eq.s32.totalorder %v889, %v1401
        %vm1662 = vcmp.eq.s32.totalorder %v888, %v1417
        %vm1663 = vcmp.eq.s32.totalorder %v889, %v1417
        %vm1664 = vcmp.eq.s32.totalorder %v888, %v1433
        %vm1665 = vcmp.eq.s32.totalorder %v889, %v1433
        %vm1666 = vcmp.eq.s32.totalorder %v888, %v1449
        %vm1667 = vcmp.eq.s32.totalorder %v889, %v1449
        %vm1668 = vcmp.eq.s32.totalorder %v888, %v1465
        %vm1669 = vcmp.eq.s32.totalorder %v889, %v1465
        %vm1670 = vcmp.eq.s32.totalorder %v888, %v1481
        %vm1671 = vcmp.eq.s32.totalorder %v889, %v1481
        %vm1672 = vcmp.eq.s32.totalorder %v888, %v1497
        %vm1673 = vcmp.eq.s32.totalorder %v889, %v1497
        %vm1674 = vcmp.eq.s32.totalorder %v888, %v1513
        %vm1675 = vcmp.eq.s32.totalorder %v889, %v1513
        %vm1676 = vcmp.eq.s32.totalorder %v888, %v1529
        %vm1677 = vcmp.eq.s32.totalorder %v889, %v1529
        %vm1678 = vcmp.eq.s32.totalorder %v888, %v1545
        %vm1679 = vcmp.eq.s32.totalorder %v889, %v1545
        %vm1680 = vcmp.eq.s32.totalorder %v888, %v1561
        %vm1681 = vcmp.eq.s32.totalorder %v889, %v1561
        %vm1682 = vcmp.eq.s32.totalorder %v888, %v1577
        %vm1683 = vcmp.eq.s32.totalorder %v889, %v1577
        %vm1684 = vcmp.eq.s32.totalorder %v888, %v1593
        %vm1685 = vcmp.eq.s32.totalorder %v889, %v1593
        %vm1686 = vcmp.eq.s32.totalorder %v888, %v1609
        %vm1687 = vcmp.eq.s32.totalorder %v889, %v1609
        %vm1688 = vcmp.eq.s32.totalorder %v888, %v1625
        %vm1689 = vcmp.eq.s32.totalorder %v889, %v1625
        %v1690 = vsel %vm1626, 1, 0
        %v1691 = vsel %vm1627, 1, 0
        %v1692 = vsel %vm1628, 1, 0
        %v1693 = vsel %vm1629, 1, 0
        %v1694 = vsel %vm1630, 1, 0
        %v1695 = vsel %vm1631, 1, 0
        %v1696 = vsel %vm1632, 1, 0
        %v1697 = vsel %vm1633, 1, 0
        %v1698 = vsel %vm1634, 1, 0
        %v1699 = vsel %vm1635, 1, 0
        %v1700 = vsel %vm1636, 1, 0
        %v1701 = vsel %vm1637, 1, 0
        %v1702 = vsel %vm1638, 1, 0
        %v1703 = vsel %vm1639, 1, 0
        %v1704 = vsel %vm1640, 1, 0
        %v1705 = vsel %vm1641, 1, 0
        %v1706 = vsel %vm1642, 1, 0
        %v1707 = vsel %vm1643, 1, 0
        %v1708 = vsel %vm1644, 1, 0
        %v1709 = vsel %vm1645, 1, 0
        %v1710 = vsel %vm1646, 1, 0
        %v1711 = vsel %vm1647, 1, 0
        %v1712 = vsel %vm1648, 1, 0
        %v1713 = vsel %vm1649, 1, 0
        %v1714 = vsel %vm1650, 1, 0
        %v1715 = vsel %vm1651, 1, 0
        %v1716 = vsel %vm1652, 1, 0
        %v1717 = vsel %vm1653, 1, 0
        %v1718 = vsel %vm1654, 1, 0
        %v1719 = vsel %vm1655, 1, 0
        %v1720 = vsel %vm1656, 1, 0
        %v1721 = vsel %vm1657, 1, 0
        %v1722 = vsel %vm1658, 1, 0
        %v1723 = vsel %vm1659, 1, 0
        %v1724 = vsel %vm1660, 1, 0
        %v1725 = vsel %vm1661, 1, 0
        %v1726 = vsel %vm1662, 1, 0
        %v1727 = vsel %vm1663, 1, 0
        %v1728 = vsel %vm1664, 1, 0
        %v1729 = vsel %vm1665, 1, 0
        %v1730 = vsel %vm1666, 1, 0
        %v1731 = vsel %vm1667, 1, 0
        %v1732 = vsel %vm1668, 1, 0
        %v1733 = vsel %vm1669, 1, 0
        %v1734 = vsel %vm1670, 1, 0
        %v1735 = vsel %vm1671, 1, 0
        %v1736 = vsel %vm1672, 1, 0
        %v1737 = vsel %vm1673, 1, 0
        %v1738 = vsel %vm1674, 1, 0
        %v1739 = vsel %vm1675, 1, 0
        %v1740 = vsel %vm1676, 1, 0
        %v1741 = vsel %vm1677, 1, 0
        %v1742 = vsel %vm1678, 1, 0
        %v1743 = vsel %vm1679, 1, 0
        %v1744 = vsel %vm1680, 1, 0
        %v1745 = vsel %vm1681, 1, 0
        %v1746 = vsel %vm1682, 1, 0
        %v1747 = vsel %vm1683, 1, 0
        %v1748 = vsel %vm1684, 1, 0
        %v1749 = vsel %vm1685, 1, 0
        %v1750 = vsel %vm1686, 1, 0
        %v1751 = vsel %vm1687, 1, 0
        %v1752 = vsel %vm1688, 1, 0
        %v1753 = vsel %vm1689, 1, 0
        %v1754 = vcvt.s32.f32 %v1690
        %v1755 = vcvt.s32.f32 %v1691
        %v1756 = vcvt.s32.f32 %v1692
        %v1757 = vcvt.s32.f32 %v1693
        %v1758 = vcvt.s32.f32 %v1694
        %v1759 = vcvt.s32.f32 %v1695
        %v1760 = vcvt.s32.f32 %v1696
        %v1761 = vcvt.s32.f32 %v1697
        %v1762 = vcvt.s32.f32 %v1698
        %v1763 = vcvt.s32.f32 %v1699
        %v1764 = vcvt.s32.f32 %v1700
        %v1765 = vcvt.s32.f32 %v1701
        %v1766 = vcvt.s32.f32 %v1702
        %v1767 = vcvt.s32.f32 %v1703
        %v1768 = vcvt.s32.f32 %v1704
        %v1769 = vcvt.s32.f32 %v1705
        %v1770 = vcvt.s32.f32 %v1706
        %v1771 = vcvt.s32.f32 %v1707
        %v1772 = vcvt.s32.f32 %v1708
        %v1773 = vcvt.s32.f32 %v1709
        %v1774 = vcvt.s32.f32 %v1710
        %v1775 = vcvt.s32.f32 %v1711
        %v1776 = vcvt.s32.f32 %v1712
        %v1777 = vcvt.s32.f32 %v1713
        %v1778 = vcvt.s32.f32 %v1714
        %v1779 = vcvt.s32.f32 %v1715
        %v1780 = vcvt.s32.f32 %v1716
        %v1781 = vcvt.s32.f32 %v1717
        %v1782 = vcvt.s32.f32 %v1718
        %v1783 = vcvt.s32.f32 %v1719
        %v1784 = vcvt.s32.f32 %v1720
        %v1785 = vcvt.s32.f32 %v1721
        %v1786 = vcvt.s32.f32 %v1722
        %v1787 = vcvt.s32.f32 %v1723
        %v1788 = vcvt.s32.f32 %v1724
        %v1789 = vcvt.s32.f32 %v1725
        %v1790 = vcvt.s32.f32 %v1726
        %v1791 = vcvt.s32.f32 %v1727
        %v1792 = vcvt.s32.f32 %v1728
        %v1793 = vcvt.s32.f32 %v1729
        %v1794 = vcvt.s32.f32 %v1730
        %v1795 = vcvt.s32.f32 %v1731
        %v1796 = vcvt.s32.f32 %v1732
        %v1797 = vcvt.s32.f32 %v1733
        %v1798 = vcvt.s32.f32 %v1734
        %v1799 = vcvt.s32.f32 %v1735
        %v1800 = vcvt.s32.f32 %v1736
        %v1801 = vcvt.s32.f32 %v1737
        %v1802 = vcvt.s32.f32 %v1738
        %v1803 = vcvt.s32.f32 %v1739
        %v1804 = vcvt.s32.f32 %v1740
        %v1805 = vcvt.s32.f32 %v1741
        %v1806 = vcvt.s32.f32 %v1742
        %v1807 = vcvt.s32.f32 %v1743
        %v1808 = vcvt.s32.f32 %v1744
        %v1809 = vcvt.s32.f32 %v1745
        %v1810 = vcvt.s32.f32 %v1746
        %v1811 = vcvt.s32.f32 %v1747
        %v1812 = vcvt.s32.f32 %v1748
        %v1813 = vcvt.s32.f32 %v1749
        %v1814 = vcvt.s32.f32 %v1750
        %v1815 = vcvt.s32.f32 %v1751
        %v1816 = vcvt.s32.f32 %v1752
        %v1817 = vcvt.s32.f32 %v1753
        %v1818 = vpack.c.bf16 %v1756, %v1754
        %v1819 = vpack.c.bf16 %v1757, %v1755
        %v1820 = vpack.c.bf16 %v1760, %v1758
        %v1821 = vpack.c.bf16 %v1761, %v1759
        %v1822 = vpack.c.bf16 %v1764, %v1762
        %v1823 = vpack.c.bf16 %v1765, %v1763
        %v1824 = vpack.c.bf16 %v1768, %v1766
        %v1825 = vpack.c.bf16 %v1769, %v1767
        %v1826 = vpack.c.bf16 %v1772, %v1770
        %v1827 = vpack.c.bf16 %v1773, %v1771
        %v1828 = vpack.c.bf16 %v1776, %v1774
        %v1829 = vpack.c.bf16 %v1777, %v1775
        %v1830 = vpack.c.bf16 %v1780, %v1778
        %v1831 = vpack.c.bf16 %v1781, %v1779
        %v1832 = vpack.c.bf16 %v1784, %v1782
        %v1833 = vpack.c.bf16 %v1785, %v1783
        %v1834 = vpack.c.bf16 %v1788, %v1786
        %v1835 = vpack.c.bf16 %v1789, %v1787
        %v1836 = vpack.c.bf16 %v1792, %v1790
        %v1837 = vpack.c.bf16 %v1793, %v1791
        %v1838 = vpack.c.bf16 %v1796, %v1794
        %v1839 = vpack.c.bf16 %v1797, %v1795
        %v1840 = vpack.c.bf16 %v1800, %v1798
        %v1841 = vpack.c.bf16 %v1801, %v1799
        %v1842 = vpack.c.bf16 %v1804, %v1802
        %v1843 = vpack.c.bf16 %v1805, %v1803
        %v1844 = vpack.c.bf16 %v1808, %v1806
        %v1845 = vpack.c.bf16 %v1809, %v1807
        %v1846 = vpack.c.bf16 %v1812, %v1810
        %v1847 = vpack.c.bf16 %v1813, %v1811
        %v1848 = vpack.c.bf16 %v1816, %v1814
        %v1849 = vpack.c.bf16 %v1817, %v1815
        %1866 = vmatpush.bf16.msra.mxu0 %v469
        %1867 = vmatpush.bf16.msra.mxu0 %v468
        %1868 = vmatpush.bf16.msra.mxu0 %v467
        %1869 = vmatpush.bf16.msra.mxu0 %v466
        %1870 = vmatpush.bf16.msra.mxu0 %v465
        %1871 = vmatpush.bf16.msra.mxu0 %v464
        %1872 = vmatpush.bf16.msra.mxu0 %v463
        %1873 = vmatpush.bf16.msra.mxu0 %v462
        %1874 = vmatmul.bf16.gmra.mxu0 %v1818
        %v1875 = vpop.f32.mrf.mxu0
        %v1876 = vadd.f32 0.0, %v1875
        %v1877 = vpop.f32.mrf.mxu0
        %v1878 = vadd.f32 0.0, %v1877
        %1879 = vmatmul.bf16.gmra.mxu0 %v1820
        %v1880 = vpop.f32.mrf.mxu0
        %v1881 = vadd.f32 0.0, %v1880
        %v1882 = vpop.f32.mrf.mxu0
        %v1883 = vadd.f32 0.0, %v1882
        %1884 = vmatmul.bf16.gmra.mxu0 %v1822
        %v1885 = vpop.f32.mrf.mxu0
        %v1886 = vadd.f32 0.0, %v1885
        %v1887 = vpop.f32.mrf.mxu0
        %v1888 = vadd.f32 0.0, %v1887
        %1889 = vmatmul.bf16.gmra.mxu0 %v1824
        %v1890 = vpop.f32.mrf.mxu0
        %v1891 = vadd.f32 0.0, %v1890
        %v1892 = vpop.f32.mrf.mxu0
        %v1893 = vadd.f32 0.0, %v1892
        %1894 = vmatmul.bf16.gmra.mxu0 %v1826
        %v1895 = vpop.f32.mrf.mxu0
        %v1896 = vadd.f32 0.0, %v1895
        %v1897 = vpop.f32.mrf.mxu0
        %v1898 = vadd.f32 0.0, %v1897
        %1899 = vmatmul.bf16.gmra.mxu0 %v1828
        %v1900 = vpop.f32.mrf.mxu0
        %v1901 = vadd.f32 0.0, %v1900
        %v1902 = vpop.f32.mrf.mxu0
        %v1903 = vadd.f32 0.0, %v1902
        %1904 = vmatmul.bf16.gmra.mxu0 %v1830
        %v1905 = vpop.f32.mrf.mxu0
        %v1906 = vadd.f32 0.0, %v1905
        %v1907 = vpop.f32.mrf.mxu0
        %v1908 = vadd.f32 0.0, %v1907
        %1909 = vmatmul.bf16.gmra.mxu0 %v1832
        %v1910 = vpop.f32.mrf.mxu0
        %v1911 = vadd.f32 0.0, %v1910
        %v1912 = vpop.f32.mrf.mxu0
        %v1913 = vadd.f32 0.0, %v1912
        %1914 = vmatmul.bf16.gmra.mxu0 %v1834
        %v1915 = vpop.f32.mrf.mxu0
        %v1916 = vadd.f32 0.0, %v1915
        %v1917 = vpop.f32.mrf.mxu0
        %v1918 = vadd.f32 0.0, %v1917
        %1919 = vmatmul.bf16.gmra.mxu0 %v1836
        %v1920 = vpop.f32.mrf.mxu0
        %v1921 = vadd.f32 0.0, %v1920
        %v1922 = vpop.f32.mrf.mxu0
        %v1923 = vadd.f32 0.0, %v1922
        %1924 = vmatmul.bf16.gmra.mxu0 %v1838
        %v1925 = vpop.f32.mrf.mxu0
        %v1926 = vadd.f32 0.0, %v1925
        %v1927 = vpop.f32.mrf.mxu0
        %v1928 = vadd.f32 0.0, %v1927
        %1929 = vmatmul.bf16.gmra.mxu0 %v1840
        %v1930 = vpop.f32.mrf.mxu0
        %v1931 = vadd.f32 0.0, %v1930
        %v1932 = vpop.f32.mrf.mxu0
        %v1933 = vadd.f32 0.0, %v1932
        %1934 = vmatmul.bf16.gmra.mxu0 %v1842
        %v1935 = vpop.f32.mrf.mxu0
        %v1936 = vadd.f32 0.0, %v1935
        %v1937 = vpop.f32.mrf.mxu0
        %v1938 = vadd.f32 0.0, %v1937
        %1939 = vmatmul.bf16.gmra.mxu0 %v1844
        %v1940 = vpop.f32.mrf.mxu0
        %v1941 = vadd.f32 0.0, %v1940
        %v1942 = vpop.f32.mrf.mxu0
        %v1943 = vadd.f32 0.0, %v1942
        %1944 = vmatmul.bf16.gmra.mxu0 %v1846
        %v1945 = vpop.f32.mrf.mxu0
        %v1946 = vadd.f32 0.0, %v1945
        %v1947 = vpop.f32.mrf.mxu0
        %v1948 = vadd.f32 0.0, %v1947
        %1949 = vmatmul.bf16.gmra.mxu0 %v1848
        %v1950 = vpop.f32.mrf.mxu0
        %v1951 = vadd.f32 0.0, %v1950
        %v1952 = vpop.f32.mrf.mxu0
        %v1953 = vadd.f32 0.0, %v1952
        %1954 = vdwg.mxu0
        %1955 = vmatpush.bf16.msra.mxu0 %v477
        %1956 = vmatpush.bf16.msra.mxu0 %v476
        %1957 = vmatpush.bf16.msra.mxu0 %v475
        %1958 = vmatpush.bf16.msra.mxu0 %v474
        %1959 = vmatpush.bf16.msra.mxu0 %v473
        %1960 = vmatpush.bf16.msra.mxu0 %v472
        %1961 = vmatpush.bf16.msra.mxu0 %v471
        %1962 = vmatpush.bf16.msra.mxu0 %v470
        %1963 = vmatmul.bf16.gmra.mxu0 %v1819
        %v1964 = vpop.f32.mrf.mxu0
        %v1965 = vadd.f32 %v1876, %v1964
        %v1966 = vpop.f32.mrf.mxu0
        %v1967 = vadd.f32 %v1878, %v1966
        %1968 = vmatmul.bf16.gmra.mxu0 %v1821
        %v1969 = vpop.f32.mrf.mxu0
        %v1970 = vadd.f32 %v1881, %v1969
        %v1971 = vpop.f32.mrf.mxu0
        %v1972 = vadd.f32 %v1883, %v1971
        %1973 = vmatmul.bf16.gmra.mxu0 %v1823
        %v1974 = vpop.f32.mrf.mxu0
        %v1975 = vadd.f32 %v1886, %v1974
        %v1976 = vpop.f32.mrf.mxu0
        %v1977 = vadd.f32 %v1888, %v1976
        %1978 = vmatmul.bf16.gmra.mxu0 %v1825
        %v1979 = vpop.f32.mrf.mxu0
        %v1980 = vadd.f32 %v1891, %v1979
        %v1981 = vpop.f32.mrf.mxu0
        %v1982 = vadd.f32 %v1893, %v1981
        %1983 = vmatmul.bf16.gmra.mxu0 %v1827
        %v1984 = vpop.f32.mrf.mxu0
        %v1985 = vadd.f32 %v1896, %v1984
        %v1986 = vpop.f32.mrf.mxu0
        %v1987 = vadd.f32 %v1898, %v1986
        %1988 = vmatmul.bf16.gmra.mxu0 %v1829
        %v1989 = vpop.f32.mrf.mxu0
        %v1990 = vadd.f32 %v1901, %v1989
        %v1991 = vpop.f32.mrf.mxu0
        %v1992 = vadd.f32 %v1903, %v1991
        %1993 = vmatmul.bf16.gmra.mxu0 %v1831
        %v1994 = vpop.f32.mrf.mxu0
        %v1995 = vadd.f32 %v1906, %v1994
        %v1996 = vpop.f32.mrf.mxu0
        %v1997 = vadd.f32 %v1908, %v1996
        %1998 = vmatmul.bf16.gmra.mxu0 %v1833
        %v1999 = vpop.f32.mrf.mxu0
        %v2000 = vadd.f32 %v1911, %v1999
        %v2001 = vpop.f32.mrf.mxu0
        %v2002 = vadd.f32 %v1913, %v2001
        %2003 = vmatmul.bf16.gmra.mxu0 %v1835
        %v2004 = vpop.f32.mrf.mxu0
        %v2005 = vadd.f32 %v1916, %v2004
        %v2006 = vpop.f32.mrf.mxu0
        %v2007 = vadd.f32 %v1918, %v2006
        %2008 = vmatmul.bf16.gmra.mxu0 %v1837
        %v2009 = vpop.f32.mrf.mxu0
        %v2010 = vadd.f32 %v1921, %v2009
        %v2011 = vpop.f32.mrf.mxu0
        %v2012 = vadd.f32 %v1923, %v2011
        %2013 = vmatmul.bf16.gmra.mxu0 %v1839
        %v2014 = vpop.f32.mrf.mxu0
        %v2015 = vadd.f32 %v1926, %v2014
        %v2016 = vpop.f32.mrf.mxu0
        %v2017 = vadd.f32 %v1928, %v2016
        %2018 = vmatmul.bf16.gmra.mxu0 %v1841
        %v2019 = vpop.f32.mrf.mxu0
        %v2020 = vadd.f32 %v1931, %v2019
        %v2021 = vpop.f32.mrf.mxu0
        %v2022 = vadd.f32 %v1933, %v2021
        %2023 = vmatmul.bf16.gmra.mxu0 %v1843
        %v2024 = vpop.f32.mrf.mxu0
        %v2025 = vadd.f32 %v1936, %v2024
        %v2026 = vpop.f32.mrf.mxu0
        %v2027 = vadd.f32 %v1938, %v2026
        %2028 = vmatmul.bf16.gmra.mxu0 %v1845
        %v2029 = vpop.f32.mrf.mxu0
        %v2030 = vadd.f32 %v1941, %v2029
        %v2031 = vpop.f32.mrf.mxu0
        %v2032 = vadd.f32 %v1943, %v2031
        %2033 = vmatmul.bf16.gmra.mxu0 %v1847
        %v2034 = vpop.f32.mrf.mxu0
        %v2035 = vadd.f32 %v1946, %v2034
        %v2036 = vpop.f32.mrf.mxu0
        %v2037 = vadd.f32 %v1948, %v2036
        %2038 = vmatmul.bf16.gmra.mxu0 %v1849
        %v2039 = vpop.f32.mrf.mxu0
        %v2040 = vadd.f32 %v1951, %v2039
        %v2041 = vpop.f32.mrf.mxu0
        %v2042 = vadd.f32 %v1953, %v2041
        %2043 = vdwg.mxu0
        %v2044 = vpack.c.bf16 %v1965, %v1965
        %v2045 = vpack.c.bf16 %v1967, %v1967
        %v2046 = vpack.c.bf16 %v1970, %v1970
        %v2047 = vpack.c.bf16 %v1972, %v1972
        %v2048 = vpack.c.bf16 %v1975, %v1975
        %v2049 = vpack.c.bf16 %v1977, %v1977
        %v2050 = vpack.c.bf16 %v1980, %v1980
        %v2051 = vpack.c.bf16 %v1982, %v1982
        %v2052 = vpack.c.bf16 %v1985, %v1985
        %v2053 = vpack.c.bf16 %v1987, %v1987
        %v2054 = vpack.c.bf16 %v1990, %v1990
        %v2055 = vpack.c.bf16 %v1992, %v1992
        %v2056 = vpack.c.bf16 %v1995, %v1995
        %v2057 = vpack.c.bf16 %v1997, %v1997
        %v2058 = vpack.c.bf16 %v2000, %v2000
        %v2059 = vpack.c.bf16 %v2002, %v2002
        %v2060 = vpack.c.bf16 %v2005, %v2005
        %v2061 = vpack.c.bf16 %v2007, %v2007
        %v2062 = vpack.c.bf16 %v2010, %v2010
        %v2063 = vpack.c.bf16 %v2012, %v2012
        %v2064 = vpack.c.bf16 %v2015, %v2015
        %v2065 = vpack.c.bf16 %v2017, %v2017
        %v2066 = vpack.c.bf16 %v2020, %v2020
        %v2067 = vpack.c.bf16 %v2022, %v2022
        %v2068 = vpack.c.bf16 %v2025, %v2025
        %v2069 = vpack.c.bf16 %v2027, %v2027
        %v2070 = vpack.c.bf16 %v2030, %v2030
        %v2071 = vpack.c.bf16 %v2032, %v2032
        %v2072 = vpack.c.bf16 %v2035, %v2035
        %v2073 = vpack.c.bf16 %v2037, %v2037
        %v2074 = vpack.c.bf16 %v2040, %v2040
        %v2075 = vpack.c.bf16 %v2042, %v2042
        %vm2076 = vcmask 519168
        %2077 = vst.msk [vmem:[%s295] sm:$0xf] %vm2076, %v2044
        %2078 = vst.msk [vmem:[%s295 + $0x4] sm:$0xf] %vm2076, %v2045
        %2079 = vst.msk [vmem:[%s295 + $0x8] sm:$0xf] %vm2076, %v2046
        %2080 = vst.msk [vmem:[%s295 + $0xc] sm:$0xf] %vm2076, %v2047
        %2081 = vst.msk [vmem:[%s295 + $0x10] sm:$0xf] %vm2076, %v2048
        %2082 = vst.msk [vmem:[%s295 + $0x14] sm:$0xf] %vm2076, %v2049
        %2083 = vst.msk [vmem:[%s295 + $0x18] sm:$0xf] %vm2076, %v2050
        %2084 = vst.msk [vmem:[%s295 + $0x1c] sm:$0xf] %vm2076, %v2051
        %2085 = vst.msk [vmem:[%s295 + $0x20] sm:$0xf] %vm2076, %v2052
        %2086 = vst.msk [vmem:[%s295 + $0x24] sm:$0xf] %vm2076, %v2053
        %2087 = vst.msk [vmem:[%s295 + $0x28] sm:$0xf] %vm2076, %v2054
        %2088 = vst.msk [vmem:[%s295 + $0x2c] sm:$0xf] %vm2076, %v2055
        %2089 = vst.msk [vmem:[%s295 + $0x30] sm:$0xf] %vm2076, %v2056
        %2090 = vst.msk [vmem:[%s295 + $0x34] sm:$0xf] %vm2076, %v2057
        %2091 = vst.msk [vmem:[%s295 + $0x38] sm:$0xf] %vm2076, %v2058
        %2092 = vst.msk [vmem:[%s295 + $0x3c] sm:$0xf] %vm2076, %v2059
        %2093 = vst.msk [vmem:[%s295 + $0x40] sm:$0xf] %vm2076, %v2060
        %2094 = vst.msk [vmem:[%s295 + $0x44] sm:$0xf] %vm2076, %v2061
        %2095 = vst.msk [vmem:[%s295 + $0x48] sm:$0xf] %vm2076, %v2062
        %2096 = vst.msk [vmem:[%s295 + $0x4c] sm:$0xf] %vm2076, %v2063
        %2097 = vst.msk [vmem:[%s295 + $0x50] sm:$0xf] %vm2076, %v2064
        %2098 = vst.msk [vmem:[%s295 + $0x54] sm:$0xf] %vm2076, %v2065
        %2099 = vst.msk [vmem:[%s295 + $0x58] sm:$0xf] %vm2076, %v2066
        %2100 = vst.msk [vmem:[%s295 + $0x5c] sm:$0xf] %vm2076, %v2067
        %2101 = vst.msk [vmem:[%s295 + $0x60] sm:$0xf] %vm2076, %v2068
        %2102 = vst.msk [vmem:[%s295 + $0x64] sm:$0xf] %vm2076, %v2069
        %2103 = vst.msk [vmem:[%s295 + $0x68] sm:$0xf] %vm2076, %v2070
        %2104 = vst.msk [vmem:[%s295 + $0x6c] sm:$0xf] %vm2076, %v2071
        %2105 = vst.msk [vmem:[%s295 + $0x70] sm:$0xf] %vm2076, %v2072
        %2106 = vst.msk [vmem:[%s295 + $0x74] sm:$0xf] %vm2076, %v2073
        %2107 = vst.msk [vmem:[%s295 + $0x78] sm:$0xf] %vm2076, %v2074
        %2108 = vst.msk [vmem:[%s295 + $0x7c] sm:$0xf] %vm2076, %v2075
        %s2109 = sadd.s32 %s24, %s25
        %v2110 = vlaneseq
        %v2111 = vshrl.u32 %v2110, 7
        %v2112 = vadd.s32 %v2111, 8
        %v2113 = vadd.s32 %v2111, 16
        %v2114 = vadd.s32 %v2111, 24
        %v2115 = vadd.s32 %v2111, 32
        %v2116 = vadd.s32 %v2111, 40
        %v2117 = vadd.s32 %v2111, 48
        %v2118 = vadd.s32 %v2111, 56
        %v2119 = vadd.s32 %v2111, 64
        %v2120 = vadd.s32 %v2111, 72
        %v2121 = vadd.s32 %v2111, 80
        %v2122 = vadd.s32 %v2111, 88
        %v2123 = vadd.s32 %v2111, 96
        %v2124 = vadd.s32 %v2111, 104
        %v2125 = vadd.s32 %v2111, 112
        %v2126 = vadd.s32 %v2111, 120
        %v2127 = vadd.s32 %v2111, 128
        %v2128 = vadd.s32 %v2111, 136
        %v2129 = vadd.s32 %v2111, 144
        %v2130 = vadd.s32 %v2111, 152
        %v2131 = vadd.s32 %v2111, 160
        %v2132 = vadd.s32 %v2111, 168
        %v2133 = vadd.s32 %v2111, 176
        %v2134 = vadd.s32 %v2111, 184
        %v2135 = vadd.s32 %v2111, 192
        %v2136 = vadd.s32 %v2111, 200
        %v2137 = vadd.s32 %v2111, 208
        %v2138 = vadd.s32 %v2111, 216
        %v2139 = vadd.s32 %v2111, 224
        %v2140 = vadd.s32 %v2111, 232
        %v2141 = vadd.s32 %v2111, 240
        %v2142 = vadd.s32 %v2111, 248
        %s2143 = smul.u32 %s2109, 256
        %v2144 = vstv %s2143
        %v2145 = vadd.s32 %v2111, %v2144
        %v2146 = vadd.s32 %v2112, %v2144
        %v2147 = vadd.s32 %v2113, %v2144
        %v2148 = vadd.s32 %v2114, %v2144
        %v2149 = vadd.s32 %v2115, %v2144
        %v2150 = vadd.s32 %v2116, %v2144
        %v2151 = vadd.s32 %v2117, %v2144
        %v2152 = vadd.s32 %v2118, %v2144
        %v2153 = vadd.s32 %v2119, %v2144
        %v2154 = vadd.s32 %v2120, %v2144
        %v2155 = vadd.s32 %v2121, %v2144
        %v2156 = vadd.s32 %v2122, %v2144
        %v2157 = vadd.s32 %v2123, %v2144
        %v2158 = vadd.s32 %v2124, %v2144
        %v2159 = vadd.s32 %v2125, %v2144
        %v2160 = vadd.s32 %v2126, %v2144
        %v2161 = vadd.s32 %v2127, %v2144
        %v2162 = vadd.s32 %v2128, %v2144
        %v2163 = vadd.s32 %v2129, %v2144
        %v2164 = vadd.s32 %v2130, %v2144
        %v2165 = vadd.s32 %v2131, %v2144
        %v2166 = vadd.s32 %v2132, %v2144
        %v2167 = vadd.s32 %v2133, %v2144
        %v2168 = vadd.s32 %v2134, %v2144
        %v2169 = vadd.s32 %v2135, %v2144
        %v2170 = vadd.s32 %v2136, %v2144
        %v2171 = vadd.s32 %v2137, %v2144
        %v2172 = vadd.s32 %v2138, %v2144
        %v2173 = vadd.s32 %v2139, %v2144
        %v2174 = vadd.s32 %v2140, %v2144
        %v2175 = vadd.s32 %v2141, %v2144
        %v2176 = vadd.s32 %v2142, %v2144
        %vm2177 = vcmp.lt.s32.totalorder %v2145, 512
        %vm2178 = vcmp.lt.s32.totalorder %v2146, 512
        %vm2179 = vcmp.lt.s32.totalorder %v2147, 512
        %vm2180 = vcmp.lt.s32.totalorder %v2148, 512
        %vm2181 = vcmp.lt.s32.totalorder %v2149, 512
        %vm2182 = vcmp.lt.s32.totalorder %v2150, 512
        %vm2183 = vcmp.lt.s32.totalorder %v2151, 512
        %vm2184 = vcmp.lt.s32.totalorder %v2152, 512
        %vm2185 = vcmp.lt.s32.totalorder %v2153, 512
        %vm2186 = vcmp.lt.s32.totalorder %v2154, 512
        %vm2187 = vcmp.lt.s32.totalorder %v2155, 512
        %vm2188 = vcmp.lt.s32.totalorder %v2156, 512
        %vm2189 = vcmp.lt.s32.totalorder %v2157, 512
        %vm2190 = vcmp.lt.s32.totalorder %v2158, 512
        %vm2191 = vcmp.lt.s32.totalorder %v2159, 512
        %vm2192 = vcmp.lt.s32.totalorder %v2160, 512
        %vm2193 = vcmp.lt.s32.totalorder %v2161, 512
        %vm2194 = vcmp.lt.s32.totalorder %v2162, 512
        %vm2195 = vcmp.lt.s32.totalorder %v2163, 512
        %vm2196 = vcmp.lt.s32.totalorder %v2164, 512
        %vm2197 = vcmp.lt.s32.totalorder %v2165, 512
        %vm2198 = vcmp.lt.s32.totalorder %v2166, 512
        %vm2199 = vcmp.lt.s32.totalorder %v2167, 512
        %vm2200 = vcmp.lt.s32.totalorder %v2168, 512
        %vm2201 = vcmp.lt.s32.totalorder %v2169, 512
        %vm2202 = vcmp.lt.s32.totalorder %v2170, 512
        %vm2203 = vcmp.lt.s32.totalorder %v2171, 512
        %vm2204 = vcmp.lt.s32.totalorder %v2172, 512
        %vm2205 = vcmp.lt.s32.totalorder %v2173, 512
        %vm2206 = vcmp.lt.s32.totalorder %v2174, 512
        %vm2207 = vcmp.lt.s32.totalorder %v2175, 512
        %vm2208 = vcmp.lt.s32.totalorder %v2176, 512
        %v2209 = vsub.f32 %v1965, %v318
        %v2210 = vsub.f32 %v1967, %v319
        %v2211 = vsub.f32 %v1970, %v320
        %v2212 = vsub.f32 %v1972, %v321
        %v2213 = vsub.f32 %v1975, %v322
        %v2214 = vsub.f32 %v1977, %v323
        %v2215 = vsub.f32 %v1980, %v324
        %v2216 = vsub.f32 %v1982, %v325
        %v2217 = vsub.f32 %v1985, %v326
        %v2218 = vsub.f32 %v1987, %v327
        %v2219 = vsub.f32 %v1990, %v328
        %v2220 = vsub.f32 %v1992, %v329
        %v2221 = vsub.f32 %v1995, %v330
        %v2222 = vsub.f32 %v1997, %v331
        %v2223 = vsub.f32 %v2000, %v332
        %v2224 = vsub.f32 %v2002, %v333
        %v2225 = vsub.f32 %v2005, %v334
        %v2226 = vsub.f32 %v2007, %v335
        %v2227 = vsub.f32 %v2010, %v336
        %v2228 = vsub.f32 %v2012, %v337
        %v2229 = vsub.f32 %v2015, %v338
        %v2230 = vsub.f32 %v2017, %v339
        %v2231 = vsub.f32 %v2020, %v340
        %v2232 = vsub.f32 %v2022, %v341
        %v2233 = vsub.f32 %v2025, %v342
        %v2234 = vsub.f32 %v2027, %v343
        %v2235 = vsub.f32 %v2030, %v344
        %v2236 = vsub.f32 %v2032, %v345
        %v2237 = vsub.f32 %v2035, %v346
        %v2238 = vsub.f32 %v2037, %v347
        %v2239 = vsub.f32 %v2040, %v348
        %v2240 = vsub.f32 %v2042, %v349
        %v2241 = vsel %vm2177, 1, 0
        %v2242 = vsel %vm2178, 1, 0
        %v2243 = vsel %vm2179, 1, 0
        %v2244 = vsel %vm2180, 1, 0
        %v2245 = vsel %vm2181, 1, 0
        %v2246 = vsel %vm2182, 1, 0
        %v2247 = vsel %vm2183, 1, 0
        %v2248 = vsel %vm2184, 1, 0
        %v2249 = vsel %vm2185, 1, 0
        %v2250 = vsel %vm2186, 1, 0
        %v2251 = vsel %vm2187, 1, 0
        %v2252 = vsel %vm2188, 1, 0
        %v2253 = vsel %vm2189, 1, 0
        %v2254 = vsel %vm2190, 1, 0
        %v2255 = vsel %vm2191, 1, 0
        %v2256 = vsel %vm2192, 1, 0
        %v2257 = vsel %vm2193, 1, 0
        %v2258 = vsel %vm2194, 1, 0
        %v2259 = vsel %vm2195, 1, 0
        %v2260 = vsel %vm2196, 1, 0
        %v2261 = vsel %vm2197, 1, 0
        %v2262 = vsel %vm2198, 1, 0
        %v2263 = vsel %vm2199, 1, 0
        %v2264 = vsel %vm2200, 1, 0
        %v2265 = vsel %vm2201, 1, 0
        %v2266 = vsel %vm2202, 1, 0
        %v2267 = vsel %vm2203, 1, 0
        %v2268 = vsel %vm2204, 1, 0
        %v2269 = vsel %vm2205, 1, 0
        %v2270 = vsel %vm2206, 1, 0
        %v2271 = vsel %vm2207, 1, 0
        %v2272 = vsel %vm2208, 1, 0
        %vm2273 = vcmp.eq.s32.totalorder %v2241, 1
        %vm2274 = vcmp.eq.s32.totalorder %v2242, 1
        %vm2275 = vcmp.eq.s32.totalorder %v2243, 1
        %vm2276 = vcmp.eq.s32.totalorder %v2244, 1
        %vm2277 = vcmp.eq.s32.totalorder %v2245, 1
        %vm2278 = vcmp.eq.s32.totalorder %v2246, 1
        %vm2279 = vcmp.eq.s32.totalorder %v2247, 1
        %vm2280 = vcmp.eq.s32.totalorder %v2248, 1
        %vm2281 = vcmp.eq.s32.totalorder %v2249, 1
        %vm2282 = vcmp.eq.s32.totalorder %v2250, 1
        %vm2283 = vcmp.eq.s32.totalorder %v2251, 1
        %vm2284 = vcmp.eq.s32.totalorder %v2252, 1
        %vm2285 = vcmp.eq.s32.totalorder %v2253, 1
        %vm2286 = vcmp.eq.s32.totalorder %v2254, 1
        %vm2287 = vcmp.eq.s32.totalorder %v2255, 1
        %vm2288 = vcmp.eq.s32.totalorder %v2256, 1
        %vm2289 = vcmp.eq.s32.totalorder %v2257, 1
        %vm2290 = vcmp.eq.s32.totalorder %v2258, 1
        %vm2291 = vcmp.eq.s32.totalorder %v2259, 1
        %vm2292 = vcmp.eq.s32.totalorder %v2260, 1
        %vm2293 = vcmp.eq.s32.totalorder %v2261, 1
        %vm2294 = vcmp.eq.s32.totalorder %v2262, 1
        %vm2295 = vcmp.eq.s32.totalorder %v2263, 1
        %vm2296 = vcmp.eq.s32.totalorder %v2264, 1
        %vm2297 = vcmp.eq.s32.totalorder %v2265, 1
        %vm2298 = vcmp.eq.s32.totalorder %v2266, 1
        %vm2299 = vcmp.eq.s32.totalorder %v2267, 1
        %vm2300 = vcmp.eq.s32.totalorder %v2268, 1
        %vm2301 = vcmp.eq.s32.totalorder %v2269, 1
        %vm2302 = vcmp.eq.s32.totalorder %v2270, 1
        %vm2303 = vcmp.eq.s32.totalorder %v2271, 1
        %vm2304 = vcmp.eq.s32.totalorder %v2272, 1
        %v2305 = vsel %vm2273, %v2209, 0.0
        %v2306 = vsel %vm2274, %v2210, 0.0
        %v2307 = vsel %vm2275, %v2211, 0.0
        %v2308 = vsel %vm2276, %v2212, 0.0
        %v2309 = vsel %vm2277, %v2213, 0.0
        %v2310 = vsel %vm2278, %v2214, 0.0
        %v2311 = vsel %vm2279, %v2215, 0.0
        %v2312 = vsel %vm2280, %v2216, 0.0
        %v2313 = vsel %vm2281, %v2217, 0.0
        %v2314 = vsel %vm2282, %v2218, 0.0
        %v2315 = vsel %vm2283, %v2219, 0.0
        %v2316 = vsel %vm2284, %v2220, 0.0
        %v2317 = vsel %vm2285, %v2221, 0.0
        %v2318 = vsel %vm2286, %v2222, 0.0
        %v2319 = vsel %vm2287, %v2223, 0.0
        %v2320 = vsel %vm2288, %v2224, 0.0
        %v2321 = vsel %vm2289, %v2225, 0.0
        %v2322 = vsel %vm2290, %v2226, 0.0
        %v2323 = vsel %vm2291, %v2227, 0.0
        %v2324 = vsel %vm2292, %v2228, 0.0
        %v2325 = vsel %vm2293, %v2229, 0.0
        %v2326 = vsel %vm2294, %v2230, 0.0
        %v2327 = vsel %vm2295, %v2231, 0.0
        %v2328 = vsel %vm2296, %v2232, 0.0
        %v2329 = vsel %vm2297, %v2233, 0.0
        %v2330 = vsel %vm2298, %v2234, 0.0
        %v2331 = vsel %vm2299, %v2235, 0.0
        %v2332 = vsel %vm2300, %v2236, 0.0
        %v2333 = vsel %vm2301, %v2237, 0.0
        %v2334 = vsel %vm2302, %v2238, 0.0
        %v2335 = vsel %vm2303, %v2239, 0.0
        %v2336 = vsel %vm2304, %v2240, 0.0
        %v2337 = vld [vmem:[%s302] sm:$0x1]
        %v2338 = vmul.f32 %v2305, %v2305
        %v2339 = vmul.f32 %v2306, %v2306
        %v2340 = vmul.f32 %v2307, %v2307
        %v2341 = vmul.f32 %v2308, %v2308
        %v2342 = vmul.f32 %v2309, %v2309
        %v2343 = vmul.f32 %v2310, %v2310
        %v2344 = vmul.f32 %v2311, %v2311
        %v2345 = vmul.f32 %v2312, %v2312
        %v2346 = vmul.f32 %v2313, %v2313
        %v2347 = vmul.f32 %v2314, %v2314
        %v2348 = vmul.f32 %v2315, %v2315
        %v2349 = vmul.f32 %v2316, %v2316
        %v2350 = vmul.f32 %v2317, %v2317
        %v2351 = vmul.f32 %v2318, %v2318
        %v2352 = vmul.f32 %v2319, %v2319
        %v2353 = vmul.f32 %v2320, %v2320
        %v2354 = vmul.f32 %v2321, %v2321
        %v2355 = vmul.f32 %v2322, %v2322
        %v2356 = vmul.f32 %v2323, %v2323
        %v2357 = vmul.f32 %v2324, %v2324
        %v2358 = vmul.f32 %v2325, %v2325
        %v2359 = vmul.f32 %v2326, %v2326
        %v2360 = vmul.f32 %v2327, %v2327
        %v2361 = vmul.f32 %v2328, %v2328
        %v2362 = vmul.f32 %v2329, %v2329
        %v2363 = vmul.f32 %v2330, %v2330
        %v2364 = vmul.f32 %v2331, %v2331
        %v2365 = vmul.f32 %v2332, %v2332
        %v2366 = vmul.f32 %v2333, %v2333
        %v2367 = vmul.f32 %v2334, %v2334
        %v2368 = vmul.f32 %v2335, %v2335
        %v2369 = vmul.f32 %v2336, %v2336
        %v2370 = vsel %vm478, %v2338, 0.0
        %v2371 = vsel %vm478, %v2339, 0.0
        %v2372 = vadd.f32 %v2370, %v2371
        %v2373 = vsel %vm478, %v2340, 0.0
        %v2374 = vadd.f32 %v2372, %v2373
        %v2375 = vsel %vm478, %v2341, 0.0
        %v2376 = vadd.f32 %v2374, %v2375
        %v2377 = vsel %vm478, %v2342, 0.0
        %v2378 = vadd.f32 %v2376, %v2377
        %v2379 = vsel %vm478, %v2343, 0.0
        %v2380 = vadd.f32 %v2378, %v2379
        %v2381 = vsel %vm478, %v2344, 0.0
        %v2382 = vadd.f32 %v2380, %v2381
        %v2383 = vsel %vm478, %v2345, 0.0
        %v2384 = vadd.f32 %v2382, %v2383
        %v2385 = vsel %vm478, %v2346, 0.0
        %v2386 = vadd.f32 %v2384, %v2385
        %v2387 = vsel %vm478, %v2347, 0.0
        %v2388 = vadd.f32 %v2386, %v2387
        %v2389 = vsel %vm478, %v2348, 0.0
        %v2390 = vadd.f32 %v2388, %v2389
        %v2391 = vsel %vm478, %v2349, 0.0
        %v2392 = vadd.f32 %v2390, %v2391
        %v2393 = vsel %vm478, %v2350, 0.0
        %v2394 = vadd.f32 %v2392, %v2393
        %v2395 = vsel %vm478, %v2351, 0.0
        %v2396 = vadd.f32 %v2394, %v2395
        %v2397 = vsel %vm478, %v2352, 0.0
        %v2398 = vadd.f32 %v2396, %v2397
        %v2399 = vsel %vm478, %v2353, 0.0
        %v2400 = vadd.f32 %v2398, %v2399
        %v2401 = vsel %vm478, %v2354, 0.0
        %v2402 = vadd.f32 %v2400, %v2401
        %v2403 = vsel %vm478, %v2355, 0.0
        %v2404 = vadd.f32 %v2402, %v2403
        %v2405 = vsel %vm478, %v2356, 0.0
        %v2406 = vadd.f32 %v2404, %v2405
        %v2407 = vsel %vm478, %v2357, 0.0
        %v2408 = vadd.f32 %v2406, %v2407
        %v2409 = vsel %vm478, %v2358, 0.0
        %v2410 = vadd.f32 %v2408, %v2409
        %v2411 = vsel %vm478, %v2359, 0.0
        %v2412 = vadd.f32 %v2410, %v2411
        %v2413 = vsel %vm478, %v2360, 0.0
        %v2414 = vadd.f32 %v2412, %v2413
        %v2415 = vsel %vm478, %v2361, 0.0
        %v2416 = vadd.f32 %v2414, %v2415
        %v2417 = vsel %vm478, %v2362, 0.0
        %v2418 = vadd.f32 %v2416, %v2417
        %v2419 = vsel %vm478, %v2363, 0.0
        %v2420 = vadd.f32 %v2418, %v2419
        %v2421 = vsel %vm478, %v2364, 0.0
        %v2422 = vadd.f32 %v2420, %v2421
        %v2423 = vsel %vm478, %v2365, 0.0
        %v2424 = vadd.f32 %v2422, %v2423
        %v2425 = vsel %vm478, %v2366, 0.0
        %v2426 = vadd.f32 %v2424, %v2425
        %v2427 = vsel %vm478, %v2367, 0.0
        %v2428 = vadd.f32 %v2426, %v2427
        %v2429 = vsel %vm478, %v2368, 0.0
        %v2430 = vadd.f32 %v2428, %v2429
        %v2431 = vsel %vm478, %v2369, 0.0
        %v2432 = vadd.f32 %v2430, %v2431
        %v2433 = vrot.slane %v2432, 4
        %v2434 = vadd.f32 %v2432, %v2433
        %v2435 = vrot.slane %v2434, 2
        %v2436 = vadd.f32 %v2434, %v2435
        %v2437 = vrot.slane %v2436, 1
        %v2438 = vadd.f32 %v2436, %v2437
        %v2439 = vadd.f32 %v2337, %v2438
        %vm2440 = vcmask 516096
        %2441 = vst.msk [vmem:[%s302] sm:$0x1] %vm2440, %v2439
        %v2442 = vld [vmem:[%s306] sm:$0x3]
        %v2443 = vsel %vm2273, %v1754, 0.0
        %v2444 = vsel %vm2273, %v1755, 0.0
        %v2445 = vsel %vm2274, %v1756, 0.0
        %v2446 = vsel %vm2274, %v1757, 0.0
        %v2447 = vsel %vm2275, %v1758, 0.0
        %v2448 = vsel %vm2275, %v1759, 0.0
        %v2449 = vsel %vm2276, %v1760, 0.0
        %v2450 = vsel %vm2276, %v1761, 0.0
        %v2451 = vsel %vm2277, %v1762, 0.0
        %v2452 = vsel %vm2277, %v1763, 0.0
        %v2453 = vsel %vm2278, %v1764, 0.0
        %v2454 = vsel %vm2278, %v1765, 0.0
        %v2455 = vsel %vm2279, %v1766, 0.0
        %v2456 = vsel %vm2279, %v1767, 0.0
        %v2457 = vsel %vm2280, %v1768, 0.0
        %v2458 = vsel %vm2280, %v1769, 0.0
        %v2459 = vsel %vm2281, %v1770, 0.0
        %v2460 = vsel %vm2281, %v1771, 0.0
        %v2461 = vsel %vm2282, %v1772, 0.0
        %v2462 = vsel %vm2282, %v1773, 0.0
        %v2463 = vsel %vm2283, %v1774, 0.0
        %v2464 = vsel %vm2283, %v1775, 0.0
        %v2465 = vsel %vm2284, %v1776, 0.0
        %v2466 = vsel %vm2284, %v1777, 0.0
        %v2467 = vsel %vm2285, %v1778, 0.0
        %v2468 = vsel %vm2285, %v1779, 0.0
        %v2469 = vsel %vm2286, %v1780, 0.0
        %v2470 = vsel %vm2286, %v1781, 0.0
        %v2471 = vsel %vm2287, %v1782, 0.0
        %v2472 = vsel %vm2287, %v1783, 0.0
        %v2473 = vsel %vm2288, %v1784, 0.0
        %v2474 = vsel %vm2288, %v1785, 0.0
        %v2475 = vsel %vm2289, %v1786, 0.0
        %v2476 = vsel %vm2289, %v1787, 0.0
        %v2477 = vsel %vm2290, %v1788, 0.0
        %v2478 = vsel %vm2290, %v1789, 0.0
        %v2479 = vsel %vm2291, %v1790, 0.0
        %v2480 = vsel %vm2291, %v1791, 0.0
        %v2481 = vsel %vm2292, %v1792, 0.0
        %v2482 = vsel %vm2292, %v1793, 0.0
        %v2483 = vsel %vm2293, %v1794, 0.0
        %v2484 = vsel %vm2293, %v1795, 0.0
        %v2485 = vsel %vm2294, %v1796, 0.0
        %v2486 = vsel %vm2294, %v1797, 0.0
        %v2487 = vsel %vm2295, %v1798, 0.0
        %v2488 = vsel %vm2295, %v1799, 0.0
        %v2489 = vsel %vm2296, %v1800, 0.0
        %v2490 = vsel %vm2296, %v1801, 0.0
        %v2491 = vsel %vm2297, %v1802, 0.0
        %v2492 = vsel %vm2297, %v1803, 0.0
        %v2493 = vsel %vm2298, %v1804, 0.0
        %v2494 = vsel %vm2298, %v1805, 0.0
        %v2495 = vsel %vm2299, %v1806, 0.0
        %v2496 = vsel %vm2299, %v1807, 0.0
        %v2497 = vsel %vm2300, %v1808, 0.0
        %v2498 = vsel %vm2300, %v1809, 0.0
        %v2499 = vsel %vm2301, %v1810, 0.0
        %v2500 = vsel %vm2301, %v1811, 0.0
        %v2501 = vsel %vm2302, %v1812, 0.0
        %v2502 = vsel %vm2302, %v1813, 0.0
        %v2503 = vsel %vm2303, %v1814, 0.0
        %v2504 = vsel %vm2303, %v1815, 0.0
        %v2505 = vsel %vm2304, %v1816, 0.0
        %v2506 = vsel %vm2304, %v1817, 0.0
        %v2507 = vadd.f32 %v2443, %v2445
        %v2508 = vadd.f32 %v2507, %v2447
        %v2509 = vadd.f32 %v2508, %v2449
        %v2510 = vadd.f32 %v2509, %v2451
        %v2511 = vadd.f32 %v2510, %v2453
        %v2512 = vadd.f32 %v2511, %v2455
        %v2513 = vadd.f32 %v2512, %v2457
        %v2514 = vadd.f32 %v2513, %v2459
        %v2515 = vadd.f32 %v2514, %v2461
        %v2516 = vadd.f32 %v2515, %v2463
        %v2517 = vadd.f32 %v2516, %v2465
        %v2518 = vadd.f32 %v2517, %v2467
        %v2519 = vadd.f32 %v2518, %v2469
        %v2520 = vadd.f32 %v2519, %v2471
        %v2521 = vadd.f32 %v2520, %v2473
        %v2522 = vadd.f32 %v2521, %v2475
        %v2523 = vadd.f32 %v2522, %v2477
        %v2524 = vadd.f32 %v2523, %v2479
        %v2525 = vadd.f32 %v2524, %v2481
        %v2526 = vadd.f32 %v2525, %v2483
        %v2527 = vadd.f32 %v2526, %v2485
        %v2528 = vadd.f32 %v2527, %v2487
        %v2529 = vadd.f32 %v2528, %v2489
        %v2530 = vadd.f32 %v2529, %v2491
        %v2531 = vadd.f32 %v2530, %v2493
        %v2532 = vadd.f32 %v2531, %v2495
        %v2533 = vadd.f32 %v2532, %v2497
        %v2534 = vadd.f32 %v2533, %v2499
        %v2535 = vadd.f32 %v2534, %v2501
        %v2536 = vadd.f32 %v2535, %v2503
        %v2537 = vadd.f32 %v2536, %v2505
        %v2538 = vrot.slane %v2537, 4
        %v2539 = vadd.f32 %v2537, %v2538
        %v2540 = vrot.slane %v2539, 2
        %v2541 = vadd.f32 %v2539, %v2540
        %v2542 = vrot.slane %v2541, 1
        %v2543 = vadd.f32 %v2541, %v2542
        %v2544 = vadd.f32 %v2444, %v2446
        %v2545 = vadd.f32 %v2544, %v2448
        %v2546 = vadd.f32 %v2545, %v2450
        %v2547 = vadd.f32 %v2546, %v2452
        %v2548 = vadd.f32 %v2547, %v2454
        %v2549 = vadd.f32 %v2548, %v2456
        %v2550 = vadd.f32 %v2549, %v2458
        %v2551 = vadd.f32 %v2550, %v2460
        %v2552 = vadd.f32 %v2551, %v2462
        %v2553 = vadd.f32 %v2552, %v2464
        %v2554 = vadd.f32 %v2553, %v2466
        %v2555 = vadd.f32 %v2554, %v2468
        %v2556 = vadd.f32 %v2555, %v2470
        %v2557 = vadd.f32 %v2556, %v2472
        %v2558 = vadd.f32 %v2557, %v2474
        %v2559 = vadd.f32 %v2558, %v2476
        %v2560 = vadd.f32 %v2559, %v2478
        %v2561 = vadd.f32 %v2560, %v2480
        %v2562 = vadd.f32 %v2561, %v2482
        %v2563 = vadd.f32 %v2562, %v2484
        %v2564 = vadd.f32 %v2563, %v2486
        %v2565 = vadd.f32 %v2564, %v2488
        %v2566 = vadd.f32 %v2565, %v2490
        %v2567 = vadd.f32 %v2566, %v2492
        %v2568 = vadd.f32 %v2567, %v2494
        %v2569 = vadd.f32 %v2568, %v2496
        %v2570 = vadd.f32 %v2569, %v2498
        %v2571 = vadd.f32 %v2570, %v2500
        %v2572 = vadd.f32 %v2571, %v2502
        %v2573 = vadd.f32 %v2572, %v2504
        %v2574 = vadd.f32 %v2573, %v2506
        %v2575 = vrot.slane %v2574, 4
        %v2576 = vadd.f32 %v2574, %v2575
        %v2577 = vrot.slane %v2576, 2
        %v2578 = vadd.f32 %v2576, %v2577
        %v2579 = vrot.slane %v2578, 1
        %v2580 = vadd.f32 %v2578, %v2579
        %v2583 = vrot.slane %v2580, 7
        %vm2584 = vcmask 1040384
        %v2585 = vsel %vm2584, %v2543, %v2583
        %v2587 = vadd.f32 %v2442, %v2585
        %v2588 = vlaneseq
        %vm2589 = vcmp.ge.s32.totalorder %v2588, 0
        %vm2590 = vcmp.lt.s32.totalorder %v2588, 256
        %vm2591 = vmand %vm2589, %vm2590
        %2592 = vst.msk [vmem:[%s306] sm:$0x3] %vm2591, %v2587
        %s2593 = sadd.s32 %s24, %s25
        %p2594 = scmp.lt.s32.totalorder %s2593, 1
        %s2595 = scalar_select %p2594, %s2593, 1
        %s2596 = smul.u32 32, %s2595
        %p2597 = scmp.lt.s32.totalorder %s2596, 63
        %s2598 = scalar_select %p2597, %s2596, 63
        %s2599 = smul.addr %s2598, 4
        %s2600 = scalar_lea.vmem %s3, %s2599
        %p2601 = scmp.lt.s32.totalorder %s24, 1
        %s2602 = scalar_select %p2601, %s24, 1
        %s2603 = scalar_lea.vmem %s4, %s2602
        %p2604 = scmp.lt.s32.totalorder %s24, 1
        %s2605 = scalar_select %p2604, %s24, 1
        %s2606 = smul.addr %s2605, 2
        %s2607 = scalar_lea.vmem %s5, %s2606
        // Predicated region
        $region41: #{_lambda_.1} parent=31 // pred_check
          %p2608 = pneg %p130
        $region42: #{_lambda_.1} parent=31 // pred_check_branch
          %2610 = sbr.rel (%p2608) target = $region44
        $region43: #{_lambda_.1} parent=31 // pred_region
          %s2611 = sadd.s32 %s24, %s25
          %p2612 = scmp.lt.s32.totalorder %s2611, 1
          %s2613 = scalar_select %p2612, %s2611, 1
          %s2614 = smul.u32 32, %s2613
        $region44: #{_lambda_.1} parent=31 // pred_fallthru
          _
        // Predicated region
        $region45: #{_lambda_.1} parent=31 // pred_check
          %p2615 = pneg %p156
        $region46: #{_lambda_.1} parent=31 // pred_check_branch
          %2617 = sbr.rel (%p2615) target = $region48
        $region47: #{_lambda_.1} parent=31 // pred_region
          _
        $region48: #{_lambda_.1} parent=31 // pred_fallthru
          _
        // Predicated region
        $region49: #{_lambda_.1} parent=31 // pred_check
          %p2618 = pneg %p182
        $region50: #{_lambda_.1} parent=31 // pred_check_branch
          %2620 = sbr.rel (%p2618) target = $region52
        $region51: #{_lambda_.1} parent=31 // pred_region
          _
        $region52: #{_lambda_.1} parent=31 // pred_fallthru
          _
      $region32: #{_lambda_.1} parent=5 // pred_fallthru
        _
      %p2621 = scmp.le.s32.totalorder 2, %s15
      // Predicated region
      $region53: #{_lambda_.1} parent=5 // pred_check
        %p2622 = pneg %p2621
      $region54: #{_lambda_.1} parent=5 // pred_check_branch
        %2624 = sbr.rel (%p2622) target = $region56
      $region55: #{_lambda_.1} parent=5 // pred_region
        %s2625 = ssub.s32 %s15, 2
        // Predicated region
        $region57: #{_lambda_.1} parent=55 // pred_check
          %p2626 = pneg %p136
        $region58: #{_lambda_.1} parent=55 // pred_check_branch
          %2628 = sbr.rel (%p2626) target = $region60
        $region59: #{_lambda_.1} parent=55 // pred_region
          %s2629 = sadd.s32 %s26, %s27
          %p2630 = scmp.lt.s32.totalorder %s2629, 1
          %s2631 = scalar_select %p2630, %s2629, 1
          %s2632 = smul.u32 32, %s2631
          %p2633 = scmp.lt.s32.totalorder %s2632, 63
          %s2634 = scalar_select %p2633, %s2632, 63
          %s2635 = smul.addr %s2634, 4
          %s2636 = scalar_lea.vmem %s3, %s2635
        $region60: #{_lambda_.1} parent=55 // pred_fallthru
          _
        // Predicated region
        $region61: #{_lambda_.1} parent=55 // pred_check
          %p2637 = pneg %p162
        $region62: #{_lambda_.1} parent=55 // pred_check_branch
          %2639 = sbr.rel (%p2637) target = $region64
        $region63: #{_lambda_.1} parent=55 // pred_region
          %p2640 = scmp.lt.s32.totalorder %s26, 1
          %s2641 = scalar_select %p2640, %s26, 1
          %s2642 = scalar_lea.vmem %s4, %s2641
        $region64: #{_lambda_.1} parent=55 // pred_fallthru
          _
        // Predicated region
        $region65: #{_lambda_.1} parent=55 // pred_check
          %p2643 = pneg %p188
        $region66: #{_lambda_.1} parent=55 // pred_check_branch
          %2645 = sbr.rel (%p2643) target = $region68
        $region67: #{_lambda_.1} parent=55 // pred_region
          %p2646 = scmp.lt.s32.totalorder %s26, 1
          %s2647 = scalar_select %p2646, %s26, 1
          %s2648 = smul.addr %s2647, 2
          %s2649 = scalar_lea.vmem %s5, %s2648
        $region68: #{_lambda_.1} parent=55 // pred_fallthru
          _
      $region56: #{_lambda_.1} parent=5 // pred_fallthru
        _
    $region6: #{_lambda_.1} parent=1 // loop_footer
      %s19 = sadd.s32 1, %s15
    $region7: #{_lambda_.1} parent=1 // loop_footer_branch
      %14 = sbr.rel target = $region3
    $region8: #{_lambda_.1} parent=1 // loop_exit
      _
    %2650 = vsyncpa [#allocation3], 1
    %s2651 = scalar_lea.sflag [#allocation3], 1
    %2652 = vsyncpa %s2651, 1

</llo_original>
